<compile_context>
chip_gen: v6e
topology: v6e:2x2x1
jax: 0.10.0
libtpu: 0.0.40
codegen_flags: <defaults>
</compile_context>

<pallas_src>
import numpy as np
import jax
import jax.numpy as jnp
from jax.experimental import pallas as pl
from jax.experimental.pallas import tpu as pltpu

# ----------------------------- problem sizes -----------------------------
B, C, H, W = 2, 4, 16, 16
HW = H * W
N = B * HW                   # flattened pixels (batch-major)
HID = 32                     # denoiser hidden width (1x1-conv channels)
TEMB_DIM = 8                 # sinusoidal time-embedding width
NUM_CLASSES = 10
T_TOTAL = 10                 # diffusion schedule length
T_SDEDIT = 3                 # self.t (sdedit starts from this step)

# ------------------------ diffusion schedule (host) ------------------------
def make_schedule(T):
    betas = np.linspace(1e-4, 2e-2, T, dtype=np.float64)
    alphas = 1.0 - betas
    acp = np.cumprod(alphas)
    acp_prev = np.concatenate([[1.0], acp[:-1]])
    return acp, acp_prev

ALPHAS_CUMPROD, ALPHAS_CUMPROD_PREV = make_schedule(T_TOTAL)

INDICES = list(range(T_SDEDIT + 1))[::-1]        # [t, t-1, ..., 0]
T_STEPS = len(INDICES)


def _build_temb_table():
    # Sinusoidal embedding for each (static) reverse-diffusion step.
    half = TEMB_DIM // 2
    freqs = np.exp(-np.log(10000.0) * np.arange(half) / half)
    rows = []
    for i in INDICES:
        ang = float(i) * freqs
        rows.append(np.concatenate([np.cos(ang), np.sin(ang)]))
    return np.asarray(rows, dtype=np.float32)               # [T_STEPS, TEMB_DIM]


def _build_scal_table():
    # [sqrt(ab_t), sqrt(1-ab_t)] for q_sample, then per step:
    # [sqrt(1-ab_i), 1/sqrt(ab_i), sqrt(ab_prev_i), sqrt(1-ab_prev_i)]
    ab_t = ALPHAS_CUMPROD[T_SDEDIT]
    vals = [np.sqrt(ab_t), np.sqrt(1.0 - ab_t)]
    for i in INDICES:
        ab = ALPHAS_CUMPROD[i]
        abp = ALPHAS_CUMPROD_PREV[i]
        vals += [np.sqrt(1.0 - ab), 1.0 / np.sqrt(ab),
                 np.sqrt(abp), np.sqrt(1.0 - abp)]
    return np.asarray(vals, dtype=np.float32)                # [2 + 4*T_STEPS]


# Block-averaging matrix: pooled[:, b] = mean over the HW pixels of batch b.
POOL_MATRIX = (np.kron(np.eye(B), np.ones((HW, 1))) / HW).astype(np.float32)  # [N, B]
TEMB_TABLE = _build_temb_table()
SCAL_TABLE = _build_scal_table()


# ----------------------------- fused Pallas kernel -----------------------------
def fused_kernel(x_ref, noise_ref, w1t_ref, b1t_ref, w2t_ref, b2t_ref,
                 wct_ref, bct_ref, pool_ref, scal_ref, o_ref):
    # ---- q_sample: x in [0,1] -> [-1,1], x_t = sqrt(ab_t) x + sqrt(1-ab_t) n ----
    x = x_ref[...] * 2.0 - 1.0                               # [C, N]
    sample = scal_ref[0] * x + scal_ref[1] * noise_ref[...]  # [C, N]

    # ---- DDIM (eta=0) reverse loop, statically unrolled over T_STEPS ----
    # eps "model": eps = W2^T @ relu(W1^T @ x + (b1 + temb_i)) + b2   (1x1 convs)
    for s in range(T_STEPS):
        base = 2 + 4 * s
        sqrt_1mab      = scal_ref[base + 0]
        inv_sqrt_ab    = scal_ref[base + 1]
        sqrt_ab_prev   = scal_ref[base + 2]
        sqrt_1mab_prev = scal_ref[base + 3]

        h = jnp.dot(w1t_ref[...], sample,
                    preferred_element_type=jnp.float32)       # [HID, N]
        h = jnp.maximum(h + b1t_ref[:, s:s + 1], 0.0)          # temb folded into bias
        eps = jnp.dot(w2t_ref[...], h,
                      preferred_element_type=jnp.float32)      # [C, N]
        eps = eps + b2t_ref[...]

        pred_x0 = (sample - sqrt_1mab * eps) * inv_sqrt_ab
        pred_x0 = jnp.clip(pred_x0, -1.0, 1.0)
        sample = sqrt_ab_prev * pred_x0 + sqrt_1mab_prev * eps

    # ---- classifier: global average pool (per batch) + linear head ----
    # mean((sample+1)/2) == (mean(sample)+1)/2, so fold the to_01 rescale
    # into the pooled [C, B] values instead of the full [C, N] activation.
    pooled_cb = jnp.dot(sample, pool_ref[...],
                        preferred_element_type=jnp.float32)    # [C, B]
    pooled_cb = (pooled_cb + 1.0) * 0.5
    logits_kb = jnp.dot(wct_ref[...], pooled_cb,
                        preferred_element_type=jnp.float32)    # [NUM_CLASSES, B]
    o_ref[...] = logits_kb + bct_ref[...]


# ----------------------------- wrapper -----------------------------
def _vmem():
    return pl.BlockSpec(memory_space=pltpu.MemorySpace.VMEM)


def _smem():
    return pl.BlockSpec(memory_space=pltpu.MemorySpace.SMEM)


@jax.jit
def denoised_classifier_forward(x_nchw, noise_nchw, params):
    # Layout glue (fused by XLA under jit): NCHW -> channels-first flattened [C, N].
    x_cn = jnp.transpose(x_nchw, (1, 0, 2, 3)).reshape(C, N)
    noise_cn = jnp.transpose(noise_nchw, (1, 0, 2, 3)).reshape(C, N)

    # Pre-transposed weights for the [C, N] / [HID, N] in-kernel layout.
    w1t = params['w1'].T                                      # [HID, C]
    w2t = params['w2'].T                                      # [C, HID]
    b2t = params['b2'].reshape(C, 1)                          # [C, 1]
    wct = params['wc'].T                                      # [NUM_CLASSES, C]
    bct = params['bc'].reshape(NUM_CLASSES, 1)                # [NUM_CLASSES, 1]

    # Fold the per-step time embedding into b1: columns of [HID, T_STEPS].
    tembs = jnp.dot(jnp.asarray(TEMB_TABLE), params['wt']) + params['bt']  # [T, HID]
    b1t = (params['b1'] + tembs).T                            # [HID, T_STEPS]

    scal = jnp.asarray(SCAL_TABLE)                            # [2 + 4*T_STEPS] (SMEM)
    pool = jnp.asarray(POOL_MATRIX)                           # [N, B]

    logits_kb = pl.pallas_call(
        fused_kernel,
        out_shape=jax.ShapeDtypeStruct((NUM_CLASSES, B), jnp.float32),
        in_specs=[_vmem()] * 9 + [_smem()],
        out_specs=_vmem(),
    )(x_cn, noise_cn, w1t, b1t, w2t, b2t, wct, bct, pool, scal)

    return logits_kb.T                                        # [B, NUM_CLASSES]

# TODO(synk): si(torch.cat(l_sample/...), '*.png') image dumping (file I/O) has
# no Pallas/JAX equivalent; the per-step sample / pred_xstart histories are not
# materialized (they are never consumed by the forward output).


# ----------------------------- parameters -----------------------------
def init_params(key):
    ks = jax.random.split(key, 4)
    s = 0.1
    return {
        'w1': s * jax.random.normal(ks[0], (C, HID), jnp.float32),
        'b1': jnp.zeros((1, HID), jnp.float32),
        'w2': s * jax.random.normal(ks[1], (HID, C), jnp.float32),
        'b2': jnp.zeros((1, C), jnp.float32),
        'wt': s * jax.random.normal(ks[2], (TEMB_DIM, HID), jnp.float32),
        'bt': jnp.zeros((1, HID), jnp.float32),
        'wc': s * jax.random.normal(ks[3], (C, NUM_CLASSES), jnp.float32),
        'bc': jnp.zeros((1, NUM_CLASSES), jnp.float32),
    }


if __name__ == "__main__":
    key = jax.random.PRNGKey(0)
    k_x, k_noise, k_p = jax.random.split(key, 3)
    x = jax.random.uniform(k_x, (B, C, H, W), jnp.float32)      # images in [0,1]
    noise = jax.random.normal(k_noise, (B, C, H, W), jnp.float32)
    params = init_params(k_p)

    logits = denoised_classifier_forward(x, noise, params)
    logits = jax.block_until_ready(logits)
    assert logits.shape == (B, NUM_CLASSES)
    assert bool(jnp.all(jnp.isfinite(logits)))
    print("KERNEL_OK")
</pallas_src>

<mosaic_0001>
module attributes {stable_mosaic.version = 11 : i64} {
  func.func @fused_kernel(%arg0: memref<4x512xf32, #tpu.memory_space<vmem>>, %arg1: memref<4x512xf32, #tpu.memory_space<vmem>>, %arg2: memref<32x4xf32, #tpu.memory_space<vmem>>, %arg3: memref<32x4xf32, #tpu.memory_space<vmem>>, %arg4: memref<4x32xf32, #tpu.memory_space<vmem>>, %arg5: memref<4x1xf32, #tpu.memory_space<vmem>>, %arg6: memref<10x4xf32, #tpu.memory_space<vmem>>, %arg7: memref<10x1xf32, #tpu.memory_space<vmem>>, %arg8: memref<512x2xf32, #tpu.memory_space<vmem>>, %arg9: memref<18xf32, #tpu.memory_space<smem>>, %arg10: memref<10x2xf32, #tpu.memory_space<vmem>>) attributes {dimension_semantics = [], scalar_prefetch = 0 : i64, scratch_operands = 0 : i64, tpu.core_type = #tpu.core_type<tc>} {
    %c0 = arith.constant 0 : index
    %c0_0 = arith.constant 0 : index
    %0 = vector.load %arg0[%c0, %c0_0] : memref<4x512xf32, #tpu.memory_space<vmem>>, vector<4x512xf32>
    %cst = arith.constant 2.000000e+00 : f32
    %1 = vector.broadcast %cst : f32 to vector<4x512xf32>
    %2 = arith.mulf %0, %1 : vector<4x512xf32>
    %cst_1 = arith.constant 1.000000e+00 : f32
    %3 = vector.broadcast %cst_1 : f32 to vector<4x512xf32>
    %4 = arith.subf %2, %3 : vector<4x512xf32>
    %c0_2 = arith.constant 0 : index
    %5 = memref.load %arg9[%c0_2] : memref<18xf32, #tpu.memory_space<smem>>
    %6 = vector.broadcast %5 : f32 to vector<4x512xf32>
    %7 = arith.mulf %6, %4 : vector<4x512xf32>
    %c1 = arith.constant 1 : index
    %8 = memref.load %arg9[%c1] : memref<18xf32, #tpu.memory_space<smem>>
    %c0_3 = arith.constant 0 : index
    %c0_4 = arith.constant 0 : index
    %9 = vector.load %arg1[%c0_3, %c0_4] : memref<4x512xf32, #tpu.memory_space<vmem>>, vector<4x512xf32>
    %10 = vector.broadcast %8 : f32 to vector<4x512xf32>
    %11 = arith.mulf %10, %9 : vector<4x512xf32>
    %12 = arith.addf %7, %11 : vector<4x512xf32>
    %c2 = arith.constant 2 : index
    %13 = memref.load %arg9[%c2] : memref<18xf32, #tpu.memory_space<smem>>
    %c3 = arith.constant 3 : index
    %14 = memref.load %arg9[%c3] : memref<18xf32, #tpu.memory_space<smem>>
    %c4 = arith.constant 4 : index
    %15 = memref.load %arg9[%c4] : memref<18xf32, #tpu.memory_space<smem>>
    %c5 = arith.constant 5 : index
    %16 = memref.load %arg9[%c5] : memref<18xf32, #tpu.memory_space<smem>>
    %c0_5 = arith.constant 0 : index
    %c0_6 = arith.constant 0 : index
    %17 = vector.load %arg2[%c0_5, %c0_6] : memref<32x4xf32, #tpu.memory_space<vmem>>, vector<32x4xf32>
    %cst_7 = arith.constant dense<0.000000e+00> : vector<32x512xf32>
    %18 = tpu.matmul %17, %12, %cst_7 {dimension_numbers = #tpu.dot_dimension_numbers<[1], [0], [0], [1], [0, 0, 1, 1], [], []>} : vector<32x4xf32>, vector<4x512xf32>, vector<32x512xf32> -> vector<32x512xf32>
    %c0_8 = arith.constant 0 : index
    %c0_9 = arith.constant 0 : index
    %19 = vector.load %arg3[%c0_8, %c0_9] : memref<32x4xf32, #tpu.memory_space<vmem>>, vector<32x1xf32>
    %20 = vector.broadcast %19 : vector<32x1xf32> to vector<32x512xf32>
    %21 = arith.addf %18, %20 : vector<32x512xf32>
    %cst_10 = arith.constant 0.000000e+00 : f32
    %22 = vector.broadcast %cst_10 : f32 to vector<32x512xf32>
    %23 = arith.maximumf %21, %22 : vector<32x512xf32>
    %c0_11 = arith.constant 0 : index
    %c0_12 = arith.constant 0 : index
    %24 = vector.load %arg4[%c0_11, %c0_12] : memref<4x32xf32, #tpu.memory_space<vmem>>, vector<4x32xf32>
    %cst_13 = arith.constant dense<0.000000e+00> : vector<4x512xf32>
    %25 = tpu.matmul %24, %23, %cst_13 {dimension_numbers = #tpu.dot_dimension_numbers<[1], [0], [0], [1], [0, 0, 1, 1], [], []>} : vector<4x32xf32>, vector<32x512xf32>, vector<4x512xf32> -> vector<4x512xf32>
    %c0_14 = arith.constant 0 : index
    %c0_15 = arith.constant 0 : index
    %26 = vector.load %arg5[%c0_14, %c0_15] : memref<4x1xf32, #tpu.memory_space<vmem>>, vector<4x1xf32>
    %27 = vector.broadcast %26 : vector<4x1xf32> to vector<4x512xf32>
    %28 = arith.addf %25, %27 : vector<4x512xf32>
    %29 = vector.broadcast %13 : f32 to vector<4x512xf32>
    %30 = arith.mulf %29, %28 : vector<4x512xf32>
    %31 = arith.subf %12, %30 : vector<4x512xf32>
    %32 = vector.broadcast %14 : f32 to vector<4x512xf32>
    %33 = arith.mulf %31, %32 : vector<4x512xf32>
    %cst_16 = arith.constant -1.000000e+00 : f32
    %cst_17 = arith.constant 1.000000e+00 : f32
    %34 = vector.broadcast %cst_16 : f32 to vector<4x512xf32>
    %35 = arith.maximumf %34, %33 : vector<4x512xf32>
    %36 = vector.broadcast %cst_17 : f32 to vector<4x512xf32>
    %37 = arith.minimumf %36, %35 : vector<4x512xf32>
    %38 = vector.broadcast %15 : f32 to vector<4x512xf32>
    %39 = arith.mulf %38, %37 : vector<4x512xf32>
    %40 = vector.broadcast %16 : f32 to vector<4x512xf32>
    %41 = arith.mulf %40, %28 : vector<4x512xf32>
    %42 = arith.addf %39, %41 : vector<4x512xf32>
    %c6 = arith.constant 6 : index
    %43 = memref.load %arg9[%c6] : memref<18xf32, #tpu.memory_space<smem>>
    %c7 = arith.constant 7 : index
    %44 = memref.load %arg9[%c7] : memref<18xf32, #tpu.memory_space<smem>>
    %c8 = arith.constant 8 : index
    %45 = memref.load %arg9[%c8] : memref<18xf32, #tpu.memory_space<smem>>
    %c9 = arith.constant 9 : index
    %46 = memref.load %arg9[%c9] : memref<18xf32, #tpu.memory_space<smem>>
    %c0_18 = arith.constant 0 : index
    %c0_19 = arith.constant 0 : index
    %47 = vector.load %arg2[%c0_18, %c0_19] : memref<32x4xf32, #tpu.memory_space<vmem>>, vector<32x4xf32>
    %cst_20 = arith.constant dense<0.000000e+00> : vector<32x512xf32>
    %48 = tpu.matmul %47, %42, %cst_20 {dimension_numbers = #tpu.dot_dimension_numbers<[1], [0], [0], [1], [0, 0, 1, 1], [], []>} : vector<32x4xf32>, vector<4x512xf32>, vector<32x512xf32> -> vector<32x512xf32>
    %c0_21 = arith.constant 0 : index
    %c1_22 = arith.constant 1 : index
    %49 = vector.load %arg3[%c0_21, %c1_22] : memref<32x4xf32, #tpu.memory_space<vmem>>, vector<32x1xf32>
    %50 = vector.broadcast %49 : vector<32x1xf32> to vector<32x512xf32>
    %51 = arith.addf %48, %50 : vector<32x512xf32>
    %cst_23 = arith.constant 0.000000e+00 : f32
    %52 = vector.broadcast %cst_23 : f32 to vector<32x512xf32>
    %53 = arith.maximumf %51, %52 : vector<32x512xf32>
    %c0_24 = arith.constant 0 : index
    %c0_25 = arith.constant 0 : index
    %54 = vector.load %arg4[%c0_24, %c0_25] : memref<4x32xf32, #tpu.memory_space<vmem>>, vector<4x32xf32>
    %cst_26 = arith.constant dense<0.000000e+00> : vector<4x512xf32>
    %55 = tpu.matmul %54, %53, %cst_26 {dimension_numbers = #tpu.dot_dimension_numbers<[1], [0], [0], [1], [0, 0, 1, 1], [], []>} : vector<4x32xf32>, vector<32x512xf32>, vector<4x512xf32> -> vector<4x512xf32>
    %c0_27 = arith.constant 0 : index
    %c0_28 = arith.constant 0 : index
    %56 = vector.load %arg5[%c0_27, %c0_28] : memref<4x1xf32, #tpu.memory_space<vmem>>, vector<4x1xf32>
    %57 = vector.broadcast %56 : vector<4x1xf32> to vector<4x512xf32>
    %58 = arith.addf %55, %57 : vector<4x512xf32>
    %59 = vector.broadcast %43 : f32 to vector<4x512xf32>
    %60 = arith.mulf %59, %58 : vector<4x512xf32>
    %61 = arith.subf %42, %60 : vector<4x512xf32>
    %62 = vector.broadcast %44 : f32 to vector<4x512xf32>
    %63 = arith.mulf %61, %62 : vector<4x512xf32>
    %cst_29 = arith.constant -1.000000e+00 : f32
    %cst_30 = arith.constant 1.000000e+00 : f32
    %64 = vector.broadcast %cst_29 : f32 to vector<4x512xf32>
    %65 = arith.maximumf %64, %63 : vector<4x512xf32>
    %66 = vector.broadcast %cst_30 : f32 to vector<4x512xf32>
    %67 = arith.minimumf %66, %65 : vector<4x512xf32>
    %68 = vector.broadcast %45 : f32 to vector<4x512xf32>
    %69 = arith.mulf %68, %67 : vector<4x512xf32>
    %70 = vector.broadcast %46 : f32 to vector<4x512xf32>
    %71 = arith.mulf %70, %58 : vector<4x512xf32>
    %72 = arith.addf %69, %71 : vector<4x512xf32>
    %c10 = arith.constant 10 : index
    %73 = memref.load %arg9[%c10] : memref<18xf32, #tpu.memory_space<smem>>
    %c11 = arith.constant 11 : index
    %74 = memref.load %arg9[%c11] : memref<18xf32, #tpu.memory_space<smem>>
    %c12 = arith.constant 12 : index
    %75 = memref.load %arg9[%c12] : memref<18xf32, #tpu.memory_space<smem>>
    %c13 = arith.constant 13 : index
    %76 = memref.load %arg9[%c13] : memref<18xf32, #tpu.memory_space<smem>>
    %c0_31 = arith.constant 0 : index
    %c0_32 = arith.constant 0 : index
    %77 = vector.load %arg2[%c0_31, %c0_32] : memref<32x4xf32, #tpu.memory_space<vmem>>, vector<32x4xf32>
    %cst_33 = arith.constant dense<0.000000e+00> : vector<32x512xf32>
    %78 = tpu.matmul %77, %72, %cst_33 {dimension_numbers = #tpu.dot_dimension_numbers<[1], [0], [0], [1], [0, 0, 1, 1], [], []>} : vector<32x4xf32>, vector<4x512xf32>, vector<32x512xf32> -> vector<32x512xf32>
    %c0_34 = arith.constant 0 : index
    %c2_35 = arith.constant 2 : index
    %79 = vector.load %arg3[%c0_34, %c2_35] : memref<32x4xf32, #tpu.memory_space<vmem>>, vector<32x1xf32>
    %80 = vector.broadcast %79 : vector<32x1xf32> to vector<32x512xf32>
    %81 = arith.addf %78, %80 : vector<32x512xf32>
    %cst_36 = arith.constant 0.000000e+00 : f32
    %82 = vector.broadcast %cst_36 : f32 to vector<32x512xf32>
    %83 = arith.maximumf %81, %82 : vector<32x512xf32>
    %c0_37 = arith.constant 0 : index
    %c0_38 = arith.constant 0 : index
    %84 = vector.load %arg4[%c0_37, %c0_38] : memref<4x32xf32, #tpu.memory_space<vmem>>, vector<4x32xf32>
    %cst_39 = arith.constant dense<0.000000e+00> : vector<4x512xf32>
    %85 = tpu.matmul %84, %83, %cst_39 {dimension_numbers = #tpu.dot_dimension_numbers<[1], [0], [0], [1], [0, 0, 1, 1], [], []>} : vector<4x32xf32>, vector<32x512xf32>, vector<4x512xf32> -> vector<4x512xf32>
    %c0_40 = arith.constant 0 : index
    %c0_41 = arith.constant 0 : index
    %86 = vector.load %arg5[%c0_40, %c0_41] : memref<4x1xf32, #tpu.memory_space<vmem>>, vector<4x1xf32>
    %87 = vector.broadcast %86 : vector<4x1xf32> to vector<4x512xf32>
    %88 = arith.addf %85, %87 : vector<4x512xf32>
    %89 = vector.broadcast %73 : f32 to vector<4x512xf32>
    %90 = arith.mulf %89, %88 : vector<4x512xf32>
    %91 = arith.subf %72, %90 : vector<4x512xf32>
    %92 = vector.broadcast %74 : f32 to vector<4x512xf32>
    %93 = arith.mulf %91, %92 : vector<4x512xf32>
    %cst_42 = arith.constant -1.000000e+00 : f32
    %cst_43 = arith.constant 1.000000e+00 : f32
    %94 = vector.broadcast %cst_42 : f32 to vector<4x512xf32>
    %95 = arith.maximumf %94, %93 : vector<4x512xf32>
    %96 = vector.broadcast %cst_43 : f32 to vector<4x512xf32>
    %97 = arith.minimumf %96, %95 : vector<4x512xf32>
    %98 = vector.broadcast %75 : f32 to vector<4x512xf32>
    %99 = arith.mulf %98, %97 : vector<4x512xf32>
    %100 = vector.broadcast %76 : f32 to vector<4x512xf32>
    %101 = arith.mulf %100, %88 : vector<4x512xf32>
    %102 = arith.addf %99, %101 : vector<4x512xf32>
    %c14 = arith.constant 14 : index
    %103 = memref.load %arg9[%c14] : memref<18xf32, #tpu.memory_space<smem>>
    %c15 = arith.constant 15 : index
    %104 = memref.load %arg9[%c15] : memref<18xf32, #tpu.memory_space<smem>>
    %c16 = arith.constant 16 : index
    %105 = memref.load %arg9[%c16] : memref<18xf32, #tpu.memory_space<smem>>
    %c17 = arith.constant 17 : index
    %106 = memref.load %arg9[%c17] : memref<18xf32, #tpu.memory_space<smem>>
    %c0_44 = arith.constant 0 : index
    %c0_45 = arith.constant 0 : index
    %107 = vector.load %arg2[%c0_44, %c0_45] : memref<32x4xf32, #tpu.memory_space<vmem>>, vector<32x4xf32>
    %cst_46 = arith.constant dense<0.000000e+00> : vector<32x512xf32>
    %108 = tpu.matmul %107, %102, %cst_46 {dimension_numbers = #tpu.dot_dimension_numbers<[1], [0], [0], [1], [0, 0, 1, 1], [], []>} : vector<32x4xf32>, vector<4x512xf32>, vector<32x512xf32> -> vector<32x512xf32>
    %c0_47 = arith.constant 0 : index
    %c3_48 = arith.constant 3 : index
    %109 = vector.load %arg3[%c0_47, %c3_48] : memref<32x4xf32, #tpu.memory_space<vmem>>, vector<32x1xf32>
    %110 = vector.broadcast %109 : vector<32x1xf32> to vector<32x512xf32>
    %111 = arith.addf %108, %110 : vector<32x512xf32>
    %cst_49 = arith.constant 0.000000e+00 : f32
    %112 = vector.broadcast %cst_49 : f32 to vector<32x512xf32>
    %113 = arith.maximumf %111, %112 : vector<32x512xf32>
    %c0_50 = arith.constant 0 : index
    %c0_51 = arith.constant 0 : index
    %114 = vector.load %arg4[%c0_50, %c0_51] : memref<4x32xf32, #tpu.memory_space<vmem>>, vector<4x32xf32>
    %cst_52 = arith.constant dense<0.000000e+00> : vector<4x512xf32>
    %115 = tpu.matmul %114, %113, %cst_52 {dimension_numbers = #tpu.dot_dimension_numbers<[1], [0], [0], [1], [0, 0, 1, 1], [], []>} : vector<4x32xf32>, vector<32x512xf32>, vector<4x512xf32> -> vector<4x512xf32>
    %c0_53 = arith.constant 0 : index
    %c0_54 = arith.constant 0 : index
    %116 = vector.load %arg5[%c0_53, %c0_54] : memref<4x1xf32, #tpu.memory_space<vmem>>, vector<4x1xf32>
    %117 = vector.broadcast %116 : vector<4x1xf32> to vector<4x512xf32>
    %118 = arith.addf %115, %117 : vector<4x512xf32>
    %119 = vector.broadcast %103 : f32 to vector<4x512xf32>
    %120 = arith.mulf %119, %118 : vector<4x512xf32>
    %121 = arith.subf %102, %120 : vector<4x512xf32>
    %122 = vector.broadcast %104 : f32 to vector<4x512xf32>
    %123 = arith.mulf %121, %122 : vector<4x512xf32>
    %cst_55 = arith.constant -1.000000e+00 : f32
    %cst_56 = arith.constant 1.000000e+00 : f32
    %124 = vector.broadcast %cst_55 : f32 to vector<4x512xf32>
    %125 = arith.maximumf %124, %123 : vector<4x512xf32>
    %126 = vector.broadcast %cst_56 : f32 to vector<4x512xf32>
    %127 = arith.minimumf %126, %125 : vector<4x512xf32>
    %128 = vector.broadcast %105 : f32 to vector<4x512xf32>
    %129 = arith.mulf %128, %127 : vector<4x512xf32>
    %130 = vector.broadcast %106 : f32 to vector<4x512xf32>
    %131 = arith.mulf %130, %118 : vector<4x512xf32>
    %132 = arith.addf %129, %131 : vector<4x512xf32>
    %c0_57 = arith.constant 0 : index
    %c0_58 = arith.constant 0 : index
    %133 = vector.load %arg8[%c0_57, %c0_58] : memref<512x2xf32, #tpu.memory_space<vmem>>, vector<512x2xf32>
    %cst_59 = arith.constant dense<0.000000e+00> : vector<4x2xf32>
    %134 = tpu.matmul %132, %133, %cst_59 {dimension_numbers = #tpu.dot_dimension_numbers<[1], [0], [0], [1], [0, 0, 1, 1], [], []>} : vector<4x512xf32>, vector<512x2xf32>, vector<4x2xf32> -> vector<4x2xf32>
    %cst_60 = arith.constant 1.000000e+00 : f32
    %135 = vector.broadcast %cst_60 : f32 to vector<4x2xf32>
    %136 = arith.addf %134, %135 : vector<4x2xf32>
    %cst_61 = arith.constant 5.000000e-01 : f32
    %137 = vector.broadcast %cst_61 : f32 to vector<4x2xf32>
    %138 = arith.mulf %136, %137 : vector<4x2xf32>
    %c0_62 = arith.constant 0 : index
    %c0_63 = arith.constant 0 : index
    %139 = vector.load %arg6[%c0_62, %c0_63] : memref<10x4xf32, #tpu.memory_space<vmem>>, vector<10x4xf32>
    %cst_64 = arith.constant dense<0.000000e+00> : vector<10x2xf32>
    %140 = tpu.matmul %139, %138, %cst_64 {dimension_numbers = #tpu.dot_dimension_numbers<[1], [0], [0], [1], [0, 0, 1, 1], [], []>} : vector<10x4xf32>, vector<4x2xf32>, vector<10x2xf32> -> vector<10x2xf32>
    %c0_65 = arith.constant 0 : index
    %c0_66 = arith.constant 0 : index
    %141 = vector.load %arg7[%c0_65, %c0_66] : memref<10x1xf32, #tpu.memory_space<vmem>>, vector<10x1xf32>
    %142 = vector.broadcast %141 : vector<10x1xf32> to vector<10x2xf32>
    %143 = arith.addf %140, %142 : vector<10x2xf32>
    %c0_67 = arith.constant 0 : index
    %c0_68 = arith.constant 0 : index
    %144 = vector.load %arg10[%c0_67, %c0_68] : memref<10x2xf32, #tpu.memory_space<vmem>>, vector<10x2xf32>
    tpu.vector_store %arg10[%c0_67, %c0_68], %143 {strides = array<i32>} : memref<10x2xf32, #tpu.memory_space<vmem>>, vector<10x2xf32>,
    return
  }
}

</mosaic_0001>

<llo_original>
// kernel: denoised_classifier_forward.1
$region0: #{denoised_classifier_forward.1}
  #allocation0 [shape = 'u32[]', space=smem, size = 0x4, offset = 0x4, fixed_abs, tag = 'smem constant byte address 0x4 - core index']
  #allocation1 [shape = 'u32[144,128]{1,0:T(1,128)}', space=vmem, size = 0x12000, scoped, tag = 'internal scratch']
  %s0 = inlined_call_operand.vmem [shape: f32[4,512], index: 0, kind: input, shape index: {}]
  %s1 = inlined_call_operand.vmem [shape: f32[4,512], index: 1, kind: input, shape index: {}]
  %s2 = inlined_call_operand.vmem [shape: f32[32,4], index: 2, kind: input, shape index: {}]
  %s3 = inlined_call_operand.vmem [shape: f32[32,4], index: 3, kind: input, shape index: {}]
  %s4 = inlined_call_operand.vmem [shape: f32[4,32], index: 4, kind: input, shape index: {}]
  %s5 = inlined_call_operand.vmem [shape: f32[4,1], index: 5, kind: input, shape index: {}]
  %s6 = inlined_call_operand.vmem [shape: f32[10,4], index: 6, kind: input, shape index: {}]
  %s7 = inlined_call_operand.vmem [shape: f32[10,1], index: 7, kind: input, shape index: {}]
  %s8 = inlined_call_operand.vmem [shape: f32[512,2], index: 8, kind: input, shape index: {}]
  %s9 = inlined_call_operand.vmem [shape: f32[18], index: 9, kind: input, shape index: {}]
  %s10 = inlined_call_operand.vmem [shape: f32[10,2], index: 10, kind: output, shape index: {}]
  %s11 = sld [smem:[#allocation0]]
  $region54: #{denoised_classifier_forward.1} parent=0
    _
  %s13 = ssub.s32 1, %s11
  %s14 = scalar_select 0, %s13, %s11
  $region1: #{denoised_classifier_forward.1} parent=0
    #allocation2 [shape = 'u8[512]{0}', space=smem, size = 0x200, scoped, tag = 'input window, operand 9, single buffered']
    #allocation3 [shape = 's32[1]{0}', space=sflag, size = 0x4, scoped, tag = 'scoped memory for denoised_classifier_forward.1']
    %15 = vsyncpa [#allocation3], 0
    // Predicated region
    $region2: #{denoised_classifier_forward.1} parent=1 // pred_check
      _
    $region3: #{denoised_classifier_forward.1} parent=1 // pred_check_branch
      %17 = sbr.rel (0) target = $region5
    $region4: #{denoised_classifier_forward.1} parent=1 // pred_region
      _
    $region5: #{denoised_classifier_forward.1} parent=1 // pred_fallthru
      _
    // Predicated region
    $region6: #{denoised_classifier_forward.1} parent=1 // pred_check
      _
    $region7: #{denoised_classifier_forward.1} parent=1 // pred_check_branch
      %19 = sbr.rel (0) target = $region9
    $region8: #{denoised_classifier_forward.1} parent=1 // pred_region
      _
    $region9: #{denoised_classifier_forward.1} parent=1 // pred_fallthru
      _
    // Predicated region
    $region10: #{denoised_classifier_forward.1} parent=1 // pred_check
      _
    $region11: #{denoised_classifier_forward.1} parent=1 // pred_check_branch
      %21 = sbr.rel (0) target = $region13
    $region12: #{denoised_classifier_forward.1} parent=1 // pred_region
      _
    $region13: #{denoised_classifier_forward.1} parent=1 // pred_fallthru
      _
    // Predicated region
    $region14: #{denoised_classifier_forward.1} parent=1 // pred_check
      _
    $region15: #{denoised_classifier_forward.1} parent=1 // pred_check_branch
      %23 = sbr.rel (0) target = $region17
    $region16: #{denoised_classifier_forward.1} parent=1 // pred_region
      _
    $region17: #{denoised_classifier_forward.1} parent=1 // pred_fallthru
      _
    // Predicated region
    $region18: #{denoised_classifier_forward.1} parent=1 // pred_check
      _
    $region19: #{denoised_classifier_forward.1} parent=1 // pred_check_branch
      %25 = sbr.rel (0) target = $region21
    $region20: #{denoised_classifier_forward.1} parent=1 // pred_region
      _
    $region21: #{denoised_classifier_forward.1} parent=1 // pred_fallthru
      _
    // Predicated region
    $region22: #{denoised_classifier_forward.1} parent=1 // pred_check
      _
    $region23: #{denoised_classifier_forward.1} parent=1 // pred_check_branch
      %27 = sbr.rel (0) target = $region25
    $region24: #{denoised_classifier_forward.1} parent=1 // pred_region
      _
    $region25: #{denoised_classifier_forward.1} parent=1 // pred_fallthru
      _
    // Predicated region
    $region26: #{denoised_classifier_forward.1} parent=1 // pred_check
      _
    $region27: #{denoised_classifier_forward.1} parent=1 // pred_check_branch
      %29 = sbr.rel (0) target = $region29
    $region28: #{denoised_classifier_forward.1} parent=1 // pred_region
      _
    $region29: #{denoised_classifier_forward.1} parent=1 // pred_fallthru
      _
    // Predicated region
    $region30: #{denoised_classifier_forward.1} parent=1 // pred_check
      _
    $region31: #{denoised_classifier_forward.1} parent=1 // pred_check_branch
      %31 = sbr.rel (0) target = $region33
    $region32: #{denoised_classifier_forward.1} parent=1 // pred_region
      _
    $region33: #{denoised_classifier_forward.1} parent=1 // pred_fallthru
      _
    // Predicated region
    $region34: #{denoised_classifier_forward.1} parent=1 // pred_check
      _
    $region35: #{denoised_classifier_forward.1} parent=1 // pred_check_branch
      %33 = sbr.rel (0) target = $region37
    $region36: #{denoised_classifier_forward.1} parent=1 // pred_region
      _
    $region37: #{denoised_classifier_forward.1} parent=1 // pred_fallthru
      _
    // Predicated region
    $region38: #{denoised_classifier_forward.1} parent=1 // pred_check
      _
    $region39: #{denoised_classifier_forward.1} parent=1 // pred_check_branch
      %35 = sbr.rel (0) target = $region41
    $region40: #{denoised_classifier_forward.1} parent=1 // pred_region
      %s37 = ssub.s32 16, 16
      %38 = vsyncadd [#allocation3], %s37
      %s40 = sshll.u32 %s9, 4
      %s41 = int_to_ptr.vmem [resolvable:$true] %s40
      %43 = dma.vmem_to_smem %s41, 16, [#allocation2], [#allocation3]
    $region41: #{denoised_classifier_forward.1} parent=1 // pred_fallthru
      _
    // Predicated region
    $region42: #{denoised_classifier_forward.1} parent=1 // pred_check
      _
    $region43: #{denoised_classifier_forward.1} parent=1 // pred_check_branch
      %45 = sbr.rel (0) target = $region45
    $region44: #{denoised_classifier_forward.1} parent=1 // pred_region
      %46 = dma.done [#allocation3], 16
    $region45: #{denoised_classifier_forward.1} parent=1 // pred_fallthru
      _
    %47 = sfence
    %v48 = vld [vmem:[%s0] sm:$0xff]
    %v49 = vld [vmem:[%s0 + $0x8] sm:$0xff]
    %v50 = vmul.f32 %v48, 2.0
    %v51 = vmul.f32 %v49, 2.0
    %v52 = vsub.f32 %v50, 1.0
    %v53 = vsub.f32 %v51, 1.0
    %s54 = sld [smem:[#allocation2]]
    %v55 = vstv %s54
    %v56 = vmul.f32 %v55, %v52
    %v57 = vmul.f32 %v55, %v53
    %s58 = sld [smem:[#allocation2 + $0x1]]
    %v59 = vld [vmem:[%s1] sm:$0xff]
    %v60 = vld [vmem:[%s1 + $0x8] sm:$0xff]
    %v61 = vstv %s58
    %v62 = vmul.f32 %v61, %v59
    %v63 = vmul.f32 %v61, %v60
    %v64 = vadd.f32 %v56, %v62
    %v65 = vadd.f32 %v57, %v63
    %s66 = sld [smem:[#allocation2 + $0x2]]
    %s67 = sld [smem:[#allocation2 + $0x3]]
    %s68 = sld [smem:[#allocation2 + $0x4]]
    %s69 = sld [smem:[#allocation2 + $0x5]]
    %v70 = vld [vmem:[%s2] sm:$0xff]
    %v71 = vld [vmem:[%s2 + $0x8] sm:$0xff]
    %v72 = vld [vmem:[%s2 + $0x10] sm:$0xff]
    %v73 = vld [vmem:[%s2 + $0x18] sm:$0xff]
    %v74 = vld [vmem:[%s3] sm:$0xff]
    %v75 = vld [vmem:[%s3 + $0x8] sm:$0xff]
    %v76 = vld [vmem:[%s3 + $0x10] sm:$0xff]
    %v77 = vld [vmem:[%s3 + $0x18] sm:$0xff]
    %79 = vset.pattern.permute.xlu0 0
    %80 = vperm.xlu0 %79, %v74
    %v81 = vpop.permute.xlu0 %80
    %84 = vset.pattern.permute.xlu0 0
    %85 = vperm.xlu0 %84, %v75
    %v86 = vpop.permute.xlu0 %85
    %89 = vset.pattern.permute.xlu0 0
    %90 = vperm.xlu0 %89, %v76
    %v91 = vpop.permute.xlu0 %90
    %94 = vset.pattern.permute.xlu0 0
    %95 = vperm.xlu0 %94, %v77
    %v96 = vpop.permute.xlu0 %95
    %v100 = vcombine.high %v64, %v64
    %v101 = vcombine.high %v65, %v65
    %vm102 = vcmask 31744
    %v104 = vsel %vm102, %v70, 0
    %v107 = vsel %vm102, %v71, 0
    %v110 = vsel %vm102, %v72, 0
    %v113 = vsel %vm102, %v73, 0
    %vm115 = vcmask 1043456
    %v116 = vsel %vm115, %v64, 0
    %v118 = vsel %vm115, %v100, 0
    %v120 = vsel %vm115, %v65, 0
    %v122 = vsel %vm115, %v101, 0
    %124 = vmatprep.subr.mxu0 0.0
    %125 = vmatpush1.msra.mxu0 0.0
    %126 = vmatprep.subr.mxu0 0.0
    %127 = vmatpush1.msra.mxu0 0.0
    %128 = vmatprep.subr.mxu0 0.0
    %129 = vmatpush1.msra.mxu0 0.0
    %130 = vmatprep.subr.mxu0 0.0
    %131 = vmatpush1.msra.mxu0 0.0
    %132 = vmatprep.subr.mxu0 0.0
    %133 = vmatpush1.msra.mxu0 0.0
    %134 = vmatprep.subr.mxu0 0.0
    %135 = vmatpush1.msra.mxu0 0.0
    %136 = vmatprep.subr.mxu0 0.0
    %137 = vmatpush1.msra.mxu0 0.0
    %138 = vmatprep.subr.mxu0 0.0
    %139 = vmatpush1.msra.mxu0 0.0
    %140 = vmatprep.subr.mxu0 0.0
    %141 = vmatpush1.msra.mxu0 0.0
    %142 = vmatprep.subr.mxu0 0.0
    %143 = vmatpush1.msra.mxu0 0.0
    %144 = vmatprep.subr.mxu0 0.0
    %145 = vmatpush1.msra.mxu0 0.0
    %146 = vmatprep.subr.mxu0 0.0
    %147 = vmatpush1.msra.mxu0 0.0
    %148 = vmatprep.subr.mxu0 0.0
    %149 = vmatpush1.msra.mxu0 0.0
    %150 = vmatprep.subr.mxu0 0.0
    %151 = vmatpush1.msra.mxu0 0.0
    %152 = vmatprep.subr.mxu0 0.0
    %153 = vmatpush1.msra.mxu0 0.0
    %154 = vmatprep.subr.mxu0 %v118
    %155 = vmatpush1.msra.mxu0 %v116
    %156 = vmatprep.subr.mxu0 0.0
    %157 = vmatpush2.msra.mxu0 0.0
    %158 = vmatprep.subr.mxu0 0.0
    %159 = vmatpush2.msra.mxu0 0.0
    %160 = vmatprep.subr.mxu0 0.0
    %161 = vmatpush2.msra.mxu0 0.0
    %162 = vmatprep.subr.mxu0 0.0
    %163 = vmatpush2.msra.mxu0 0.0
    %164 = vmatprep.subr.mxu0 0.0
    %165 = vmatpush2.msra.mxu0 0.0
    %166 = vmatprep.subr.mxu0 0.0
    %167 = vmatpush2.msra.mxu0 0.0
    %168 = vmatprep.subr.mxu0 0.0
    %169 = vmatpush2.msra.mxu0 0.0
    %170 = vmatprep.subr.mxu0 0.0
    %171 = vmatpush2.msra.mxu0 0.0
    %172 = vmatprep.subr.mxu0 0.0
    %173 = vmatpush2.msra.mxu0 0.0
    %174 = vmatprep.subr.mxu0 0.0
    %175 = vmatpush2.msra.mxu0 0.0
    %176 = vmatprep.subr.mxu0 0.0
    %177 = vmatpush2.msra.mxu0 0.0
    %178 = vmatprep.subr.mxu0 0.0
    %179 = vmatpush2.msra.mxu0 0.0
    %180 = vmatprep.subr.mxu0 0.0
    %181 = vmatpush2.msra.mxu0 0.0
    %182 = vmatprep.subr.mxu0 0.0
    %183 = vmatpush2.msra.mxu0 0.0
    %184 = vmatprep.subr.mxu0 0.0
    %185 = vmatpush2.msra.mxu0 0.0
    %186 = vmatprep.subr.mxu0 0.0
    %187 = vmatpush2.msra.mxu0 0.0
    %188 = vmatprep.mubr.f32.mxu0 0.0
    %189 = vmatmul.mubr.f32.gmra.mxu0 %v104
    %v190 = vpop.f32.mrf.mxu0
    %v191 = vadd.f32 %v81, %v190
    %v192 = vpop.f32.mrf.mxu0
    %v193 = vadd.f32 %v81, %v192
    %194 = vmatprep.mubr.f32.mxu0 0.0
    %195 = vmatmul.mubr.f32.gmra.mxu0 %v107
    %v196 = vpop.f32.mrf.mxu0
    %v197 = vadd.f32 %v86, %v196
    %v198 = vpop.f32.mrf.mxu0
    %v199 = vadd.f32 %v86, %v198
    %200 = vmatprep.mubr.f32.mxu0 0.0
    %201 = vmatmul.mubr.f32.gmra.mxu0 %v110
    %v202 = vpop.f32.mrf.mxu0
    %v203 = vadd.f32 %v91, %v202
    %v204 = vpop.f32.mrf.mxu0
    %v205 = vadd.f32 %v91, %v204
    %206 = vmatprep.mubr.f32.mxu0 0.0
    %207 = vmatmul.mubr.f32.gmra.mxu0 %v113
    %v208 = vpop.f32.mrf.mxu0
    %v209 = vadd.f32 %v96, %v208
    %v210 = vpop.f32.mrf.mxu0
    %v211 = vadd.f32 %v96, %v210
    %212 = vdwg.mxu0
    %213 = vmatprep.subr.mxu0 0.0
    %214 = vmatpush1.msra.mxu0 0.0
    %215 = vmatprep.subr.mxu0 0.0
    %216 = vmatpush1.msra.mxu0 0.0
    %217 = vmatprep.subr.mxu0 0.0
    %218 = vmatpush1.msra.mxu0 0.0
    %219 = vmatprep.subr.mxu0 0.0
    %220 = vmatpush1.msra.mxu0 0.0
    %221 = vmatprep.subr.mxu0 0.0
    %222 = vmatpush1.msra.mxu0 0.0
    %223 = vmatprep.subr.mxu0 0.0
    %224 = vmatpush1.msra.mxu0 0.0
    %225 = vmatprep.subr.mxu0 0.0
    %226 = vmatpush1.msra.mxu0 0.0
    %227 = vmatprep.subr.mxu0 0.0
    %228 = vmatpush1.msra.mxu0 0.0
    %229 = vmatprep.subr.mxu0 0.0
    %230 = vmatpush1.msra.mxu0 0.0
    %231 = vmatprep.subr.mxu0 0.0
    %232 = vmatpush1.msra.mxu0 0.0
    %233 = vmatprep.subr.mxu0 0.0
    %234 = vmatpush1.msra.mxu0 0.0
    %235 = vmatprep.subr.mxu0 0.0
    %236 = vmatpush1.msra.mxu0 0.0
    %237 = vmatprep.subr.mxu0 0.0
    %238 = vmatpush1.msra.mxu0 0.0
    %239 = vmatprep.subr.mxu0 0.0
    %240 = vmatpush1.msra.mxu0 0.0
    %241 = vmatprep.subr.mxu0 0.0
    %242 = vmatpush1.msra.mxu0 0.0
    %243 = vmatprep.subr.mxu0 %v122
    %244 = vmatpush1.msra.mxu0 %v120
    %245 = vmatprep.subr.mxu0 0.0
    %246 = vmatpush2.msra.mxu0 0.0
    %247 = vmatprep.subr.mxu0 0.0
    %248 = vmatpush2.msra.mxu0 0.0
    %249 = vmatprep.subr.mxu0 0.0
    %250 = vmatpush2.msra.mxu0 0.0
    %251 = vmatprep.subr.mxu0 0.0
    %252 = vmatpush2.msra.mxu0 0.0
    %253 = vmatprep.subr.mxu0 0.0
    %254 = vmatpush2.msra.mxu0 0.0
    %255 = vmatprep.subr.mxu0 0.0
    %256 = vmatpush2.msra.mxu0 0.0
    %257 = vmatprep.subr.mxu0 0.0
    %258 = vmatpush2.msra.mxu0 0.0
    %259 = vmatprep.subr.mxu0 0.0
    %260 = vmatpush2.msra.mxu0 0.0
    %261 = vmatprep.subr.mxu0 0.0
    %262 = vmatpush2.msra.mxu0 0.0
    %263 = vmatprep.subr.mxu0 0.0
    %264 = vmatpush2.msra.mxu0 0.0
    %265 = vmatprep.subr.mxu0 0.0
    %266 = vmatpush2.msra.mxu0 0.0
    %267 = vmatprep.subr.mxu0 0.0
    %268 = vmatpush2.msra.mxu0 0.0
    %269 = vmatprep.subr.mxu0 0.0
    %270 = vmatpush2.msra.mxu0 0.0
    %271 = vmatprep.subr.mxu0 0.0
    %272 = vmatpush2.msra.mxu0 0.0
    %273 = vmatprep.subr.mxu0 0.0
    %274 = vmatpush2.msra.mxu0 0.0
    %275 = vmatprep.subr.mxu0 0.0
    %276 = vmatpush2.msra.mxu0 0.0
    %277 = vmatprep.mubr.f32.mxu0 0.0
    %278 = vmatmul.mubr.f32.gmra.mxu0 %v104
    %v279 = vpop.f32.mrf.mxu0
    %v280 = vadd.f32 %v81, %v279
    %v281 = vpop.f32.mrf.mxu0
    %v282 = vadd.f32 %v81, %v281
    %283 = vmatprep.mubr.f32.mxu0 0.0
    %284 = vmatmul.mubr.f32.gmra.mxu0 %v107
    %v285 = vpop.f32.mrf.mxu0
    %v286 = vadd.f32 %v86, %v285
    %v287 = vpop.f32.mrf.mxu0
    %v288 = vadd.f32 %v86, %v287
    %289 = vmatprep.mubr.f32.mxu0 0.0
    %290 = vmatmul.mubr.f32.gmra.mxu0 %v110
    %v291 = vpop.f32.mrf.mxu0
    %v292 = vadd.f32 %v91, %v291
    %v293 = vpop.f32.mrf.mxu0
    %v294 = vadd.f32 %v91, %v293
    %295 = vmatprep.mubr.f32.mxu0 0.0
    %296 = vmatmul.mubr.f32.gmra.mxu0 %v113
    %v297 = vpop.f32.mrf.mxu0
    %v298 = vadd.f32 %v96, %v297
    %v299 = vpop.f32.mrf.mxu0
    %v300 = vadd.f32 %v96, %v299
    %301 = vdwg.mxu0
    %v302 = vmax.f32 %v191, 0.0
    %v303 = vmax.f32 %v193, 0.0
    %v304 = vmax.f32 %v280, 0.0
    %v305 = vmax.f32 %v282, 0.0
    %v306 = vmax.f32 %v197, 0.0
    %v307 = vmax.f32 %v199, 0.0
    %v308 = vmax.f32 %v286, 0.0
    %v309 = vmax.f32 %v288, 0.0
    %v310 = vmax.f32 %v203, 0.0
    %v311 = vmax.f32 %v205, 0.0
    %v312 = vmax.f32 %v292, 0.0
    %v313 = vmax.f32 %v294, 0.0
    %v314 = vmax.f32 %v209, 0.0
    %v315 = vmax.f32 %v211, 0.0
    %v316 = vmax.f32 %v298, 0.0
    %v317 = vmax.f32 %v300, 0.0
    %v318 = vld [vmem:[%s4] sm:$0xf]
    %v319 = vld [vmem:[%s5] sm:$0xf]
    %321 = vset.pattern.permute.xlu0 0
    %322 = vperm.xlu0 %321, %v319
    %v323 = vpop.permute.xlu0 %322
    %vm325 = vcmask 261120
    %v327 = vsel %vm325, %v318, 0
    %329 = vmatprep.subr.mxu0 0.0
    %330 = vmatpush1.msra.mxu0 0.0
    %331 = vmatprep.subr.mxu0 0.0
    %332 = vmatpush1.msra.mxu0 0.0
    %333 = vmatprep.subr.mxu0 0.0
    %334 = vmatpush1.msra.mxu0 0.0
    %335 = vmatprep.subr.mxu0 0.0
    %336 = vmatpush1.msra.mxu0 0.0
    %337 = vmatprep.subr.mxu0 0.0
    %338 = vmatpush1.msra.mxu0 0.0
    %339 = vmatprep.subr.mxu0 0.0
    %340 = vmatpush1.msra.mxu0 0.0
    %341 = vmatprep.subr.mxu0 0.0
    %342 = vmatpush1.msra.mxu0 0.0
    %343 = vmatprep.subr.mxu0 0.0
    %344 = vmatpush1.msra.mxu0 0.0
    %345 = vmatprep.subr.mxu0 0.0
    %346 = vmatpush1.msra.mxu0 0.0
    %347 = vmatprep.subr.mxu0 0.0
    %348 = vmatpush1.msra.mxu0 0.0
    %349 = vmatprep.subr.mxu0 0.0
    %350 = vmatpush1.msra.mxu0 0.0
    %351 = vmatprep.subr.mxu0 0.0
    %352 = vmatpush1.msra.mxu0 0.0
    %353 = vmatprep.subr.mxu0 %v315
    %354 = vmatpush1.msra.mxu0 %v314
    %355 = vmatprep.subr.mxu0 %v311
    %356 = vmatpush1.msra.mxu0 %v310
    %357 = vmatprep.subr.mxu0 %v307
    %358 = vmatpush1.msra.mxu0 %v306
    %359 = vmatprep.subr.mxu0 %v303
    %360 = vmatpush1.msra.mxu0 %v302
    %361 = vmatprep.subr.mxu0 0.0
    %362 = vmatpush2.msra.mxu0 0.0
    %363 = vmatprep.subr.mxu0 0.0
    %364 = vmatpush2.msra.mxu0 0.0
    %365 = vmatprep.subr.mxu0 0.0
    %366 = vmatpush2.msra.mxu0 0.0
    %367 = vmatprep.subr.mxu0 0.0
    %368 = vmatpush2.msra.mxu0 0.0
    %369 = vmatprep.subr.mxu0 0.0
    %370 = vmatpush2.msra.mxu0 0.0
    %371 = vmatprep.subr.mxu0 0.0
    %372 = vmatpush2.msra.mxu0 0.0
    %373 = vmatprep.subr.mxu0 0.0
    %374 = vmatpush2.msra.mxu0 0.0
    %375 = vmatprep.subr.mxu0 0.0
    %376 = vmatpush2.msra.mxu0 0.0
    %377 = vmatprep.subr.mxu0 0.0
    %378 = vmatpush2.msra.mxu0 0.0
    %379 = vmatprep.subr.mxu0 0.0
    %380 = vmatpush2.msra.mxu0 0.0
    %381 = vmatprep.subr.mxu0 0.0
    %382 = vmatpush2.msra.mxu0 0.0
    %383 = vmatprep.subr.mxu0 0.0
    %384 = vmatpush2.msra.mxu0 0.0
    %385 = vmatprep.subr.mxu0 0.0
    %386 = vmatpush2.msra.mxu0 0.0
    %387 = vmatprep.subr.mxu0 0.0
    %388 = vmatpush2.msra.mxu0 0.0
    %389 = vmatprep.subr.mxu0 0.0
    %390 = vmatpush2.msra.mxu0 0.0
    %391 = vmatprep.subr.mxu0 0.0
    %392 = vmatpush2.msra.mxu0 0.0
    %393 = vmatprep.mubr.f32.mxu0 0.0
    %394 = vmatmul.mubr.f32.gmra.mxu0 %v327
    %v395 = vpop.f32.mrf.mxu0
    %v396 = vadd.f32 %v323, %v395
    %v397 = vpop.f32.mrf.mxu0
    %v398 = vadd.f32 %v323, %v397
    %399 = vdwg.mxu0
    %400 = vmatprep.subr.mxu0 0.0
    %401 = vmatpush1.msra.mxu0 0.0
    %402 = vmatprep.subr.mxu0 0.0
    %403 = vmatpush1.msra.mxu0 0.0
    %404 = vmatprep.subr.mxu0 0.0
    %405 = vmatpush1.msra.mxu0 0.0
    %406 = vmatprep.subr.mxu0 0.0
    %407 = vmatpush1.msra.mxu0 0.0
    %408 = vmatprep.subr.mxu0 0.0
    %409 = vmatpush1.msra.mxu0 0.0
    %410 = vmatprep.subr.mxu0 0.0
    %411 = vmatpush1.msra.mxu0 0.0
    %412 = vmatprep.subr.mxu0 0.0
    %413 = vmatpush1.msra.mxu0 0.0
    %414 = vmatprep.subr.mxu0 0.0
    %415 = vmatpush1.msra.mxu0 0.0
    %416 = vmatprep.subr.mxu0 0.0
    %417 = vmatpush1.msra.mxu0 0.0
    %418 = vmatprep.subr.mxu0 0.0
    %419 = vmatpush1.msra.mxu0 0.0
    %420 = vmatprep.subr.mxu0 0.0
    %421 = vmatpush1.msra.mxu0 0.0
    %422 = vmatprep.subr.mxu0 0.0
    %423 = vmatpush1.msra.mxu0 0.0
    %424 = vmatprep.subr.mxu0 %v317
    %425 = vmatpush1.msra.mxu0 %v316
    %426 = vmatprep.subr.mxu0 %v313
    %427 = vmatpush1.msra.mxu0 %v312
    %428 = vmatprep.subr.mxu0 %v309
    %429 = vmatpush1.msra.mxu0 %v308
    %430 = vmatprep.subr.mxu0 %v305
    %431 = vmatpush1.msra.mxu0 %v304
    %432 = vmatprep.subr.mxu0 0.0
    %433 = vmatpush2.msra.mxu0 0.0
    %434 = vmatprep.subr.mxu0 0.0
    %435 = vmatpush2.msra.mxu0 0.0
    %436 = vmatprep.subr.mxu0 0.0
    %437 = vmatpush2.msra.mxu0 0.0
    %438 = vmatprep.subr.mxu0 0.0
    %439 = vmatpush2.msra.mxu0 0.0
    %440 = vmatprep.subr.mxu0 0.0
    %441 = vmatpush2.msra.mxu0 0.0
    %442 = vmatprep.subr.mxu0 0.0
    %443 = vmatpush2.msra.mxu0 0.0
    %444 = vmatprep.subr.mxu0 0.0
    %445 = vmatpush2.msra.mxu0 0.0
    %446 = vmatprep.subr.mxu0 0.0
    %447 = vmatpush2.msra.mxu0 0.0
    %448 = vmatprep.subr.mxu0 0.0
    %449 = vmatpush2.msra.mxu0 0.0
    %450 = vmatprep.subr.mxu0 0.0
    %451 = vmatpush2.msra.mxu0 0.0
    %452 = vmatprep.subr.mxu0 0.0
    %453 = vmatpush2.msra.mxu0 0.0
    %454 = vmatprep.subr.mxu0 0.0
    %455 = vmatpush2.msra.mxu0 0.0
    %456 = vmatprep.subr.mxu0 0.0
    %457 = vmatpush2.msra.mxu0 0.0
    %458 = vmatprep.subr.mxu0 0.0
    %459 = vmatpush2.msra.mxu0 0.0
    %460 = vmatprep.subr.mxu0 0.0
    %461 = vmatpush2.msra.mxu0 0.0
    %462 = vmatprep.subr.mxu0 0.0
    %463 = vmatpush2.msra.mxu0 0.0
    %464 = vmatprep.mubr.f32.mxu0 0.0
    %465 = vmatmul.mubr.f32.gmra.mxu0 %v327
    %v466 = vpop.f32.mrf.mxu0
    %v467 = vadd.f32 %v323, %v466
    %v468 = vpop.f32.mrf.mxu0
    %v469 = vadd.f32 %v323, %v468
    %470 = vdwg.mxu0
    %v471 = vstv %s66
    %v472 = vmul.f32 %v471, %v396
    %v473 = vmul.f32 %v471, %v398
    %v474 = vmul.f32 %v471, %v467
    %v475 = vmul.f32 %v471, %v469
    %v480 = vcombine.low %v472, %v473
    %v481 = vcombine.low %v474, %v475
    %v484 = vsub.f32 %v64, %v480
    %v485 = vsub.f32 %v65, %v481
    %v486 = vstv %s67
    %v487 = vmul.f32 %v484, %v486
    %v488 = vmul.f32 %v485, %v486
    %v489 = vmax.f32 %v487, -1.0
    %v490 = vmax.f32 %v488, -1.0
    %v491 = vmin.f32 %v489, 1.0
    %v492 = vmin.f32 %v490, 1.0
    %v493 = vstv %s68
    %v494 = vmul.f32 %v493, %v491
    %v495 = vmul.f32 %v493, %v492
    %v496 = vstv %s69
    %v497 = vmul.f32 %v496, %v396
    %v498 = vmul.f32 %v496, %v398
    %v499 = vmul.f32 %v496, %v467
    %v500 = vmul.f32 %v496, %v469
    %v505 = vcombine.low %v497, %v498
    %v506 = vcombine.low %v499, %v500
    %v509 = vadd.f32 %v494, %v505
    %v510 = vadd.f32 %v495, %v506
    %s511 = sld [smem:[#allocation2 + $0x6]]
    %s512 = sld [smem:[#allocation2 + $0x7]]
    %s513 = sld [smem:[#allocation2 + $0x8]]
    %s514 = sld [smem:[#allocation2 + $0x9]]
    %v515 = vld [vmem:[%s3] sm:$0xff]
    %v516 = vld [vmem:[%s3 + $0x8] sm:$0xff]
    %v517 = vld [vmem:[%s3 + $0x10] sm:$0xff]
    %v518 = vld [vmem:[%s3 + $0x18] sm:$0xff]
    %520 = vset.pattern.permute.xlu0 1
    %521 = vperm.xlu0 %520, %v515
    %v522 = vpop.permute.xlu0 %521
    %525 = vset.pattern.permute.xlu0 1
    %526 = vperm.xlu0 %525, %v516
    %v527 = vpop.permute.xlu0 %526
    %530 = vset.pattern.permute.xlu0 1
    %531 = vperm.xlu0 %530, %v517
    %v532 = vpop.permute.xlu0 %531
    %535 = vset.pattern.permute.xlu0 1
    %536 = vperm.xlu0 %535, %v518
    %v537 = vpop.permute.xlu0 %536
    %v541 = vcombine.high %v509, %v509
    %v542 = vcombine.high %v510, %v510
    %v543 = vsel %vm115, %v509, 0
    %v545 = vsel %vm115, %v541, 0
    %v547 = vsel %vm115, %v510, 0
    %v549 = vsel %vm115, %v542, 0
    %551 = vmatprep.subr.mxu0 0.0
    %552 = vmatpush1.msra.mxu0 0.0
    %553 = vmatprep.subr.mxu0 0.0
    %554 = vmatpush1.msra.mxu0 0.0
    %555 = vmatprep.subr.mxu0 0.0
    %556 = vmatpush1.msra.mxu0 0.0
    %557 = vmatprep.subr.mxu0 0.0
    %558 = vmatpush1.msra.mxu0 0.0
    %559 = vmatprep.subr.mxu0 0.0
    %560 = vmatpush1.msra.mxu0 0.0
    %561 = vmatprep.subr.mxu0 0.0
    %562 = vmatpush1.msra.mxu0 0.0
    %563 = vmatprep.subr.mxu0 0.0
    %564 = vmatpush1.msra.mxu0 0.0
    %565 = vmatprep.subr.mxu0 0.0
    %566 = vmatpush1.msra.mxu0 0.0
    %567 = vmatprep.subr.mxu0 0.0
    %568 = vmatpush1.msra.mxu0 0.0
    %569 = vmatprep.subr.mxu0 0.0
    %570 = vmatpush1.msra.mxu0 0.0
    %571 = vmatprep.subr.mxu0 0.0
    %572 = vmatpush1.msra.mxu0 0.0
    %573 = vmatprep.subr.mxu0 0.0
    %574 = vmatpush1.msra.mxu0 0.0
    %575 = vmatprep.subr.mxu0 0.0
    %576 = vmatpush1.msra.mxu0 0.0
    %577 = vmatprep.subr.mxu0 0.0
    %578 = vmatpush1.msra.mxu0 0.0
    %579 = vmatprep.subr.mxu0 0.0
    %580 = vmatpush1.msra.mxu0 0.0
    %581 = vmatprep.subr.mxu0 %v545
    %582 = vmatpush1.msra.mxu0 %v543
    %583 = vmatprep.subr.mxu0 0.0
    %584 = vmatpush2.msra.mxu0 0.0
    %585 = vmatprep.subr.mxu0 0.0
    %586 = vmatpush2.msra.mxu0 0.0
    %587 = vmatprep.subr.mxu0 0.0
    %588 = vmatpush2.msra.mxu0 0.0
    %589 = vmatprep.subr.mxu0 0.0
    %590 = vmatpush2.msra.mxu0 0.0
    %591 = vmatprep.subr.mxu0 0.0
    %592 = vmatpush2.msra.mxu0 0.0
    %593 = vmatprep.subr.mxu0 0.0
    %594 = vmatpush2.msra.mxu0 0.0
    %595 = vmatprep.subr.mxu0 0.0
    %596 = vmatpush2.msra.mxu0 0.0
    %597 = vmatprep.subr.mxu0 0.0
    %598 = vmatpush2.msra.mxu0 0.0
    %599 = vmatprep.subr.mxu0 0.0
    %600 = vmatpush2.msra.mxu0 0.0
    %601 = vmatprep.subr.mxu0 0.0
    %602 = vmatpush2.msra.mxu0 0.0
    %603 = vmatprep.subr.mxu0 0.0
    %604 = vmatpush2.msra.mxu0 0.0
    %605 = vmatprep.subr.mxu0 0.0
    %606 = vmatpush2.msra.mxu0 0.0
    %607 = vmatprep.subr.mxu0 0.0
    %608 = vmatpush2.msra.mxu0 0.0
    %609 = vmatprep.subr.mxu0 0.0
    %610 = vmatpush2.msra.mxu0 0.0
    %611 = vmatprep.subr.mxu0 0.0
    %612 = vmatpush2.msra.mxu0 0.0
    %613 = vmatprep.subr.mxu0 0.0
    %614 = vmatpush2.msra.mxu0 0.0
    %615 = vmatprep.mubr.f32.mxu0 0.0
    %616 = vmatmul.mubr.f32.gmra.mxu0 %v104
    %v617 = vpop.f32.mrf.mxu0
    %v618 = vadd.f32 %v522, %v617
    %v619 = vpop.f32.mrf.mxu0
    %v620 = vadd.f32 %v522, %v619
    %621 = vmatprep.mubr.f32.mxu0 0.0
    %622 = vmatmul.mubr.f32.gmra.mxu0 %v107
    %v623 = vpop.f32.mrf.mxu0
    %v624 = vadd.f32 %v527, %v623
    %v625 = vpop.f32.mrf.mxu0
    %v626 = vadd.f32 %v527, %v625
    %627 = vmatprep.mubr.f32.mxu0 0.0
    %628 = vmatmul.mubr.f32.gmra.mxu0 %v110
    %v629 = vpop.f32.mrf.mxu0
    %v630 = vadd.f32 %v532, %v629
    %v631 = vpop.f32.mrf.mxu0
    %v632 = vadd.f32 %v532, %v631
    %633 = vmatprep.mubr.f32.mxu0 0.0
    %634 = vmatmul.mubr.f32.gmra.mxu0 %v113
    %v635 = vpop.f32.mrf.mxu0
    %v636 = vadd.f32 %v537, %v635
    %v637 = vpop.f32.mrf.mxu0
    %v638 = vadd.f32 %v537, %v637
    %639 = vdwg.mxu0
    %640 = vmatprep.subr.mxu0 0.0
    %641 = vmatpush1.msra.mxu0 0.0
    %642 = vmatprep.subr.mxu0 0.0
    %643 = vmatpush1.msra.mxu0 0.0
    %644 = vmatprep.subr.mxu0 0.0
    %645 = vmatpush1.msra.mxu0 0.0
    %646 = vmatprep.subr.mxu0 0.0
    %647 = vmatpush1.msra.mxu0 0.0
    %648 = vmatprep.subr.mxu0 0.0
    %649 = vmatpush1.msra.mxu0 0.0
    %650 = vmatprep.subr.mxu0 0.0
    %651 = vmatpush1.msra.mxu0 0.0
    %652 = vmatprep.subr.mxu0 0.0
    %653 = vmatpush1.msra.mxu0 0.0
    %654 = vmatprep.subr.mxu0 0.0
    %655 = vmatpush1.msra.mxu0 0.0
    %656 = vmatprep.subr.mxu0 0.0
    %657 = vmatpush1.msra.mxu0 0.0
    %658 = vmatprep.subr.mxu0 0.0
    %659 = vmatpush1.msra.mxu0 0.0
    %660 = vmatprep.subr.mxu0 0.0
    %661 = vmatpush1.msra.mxu0 0.0
    %662 = vmatprep.subr.mxu0 0.0
    %663 = vmatpush1.msra.mxu0 0.0
    %664 = vmatprep.subr.mxu0 0.0
    %665 = vmatpush1.msra.mxu0 0.0
    %666 = vmatprep.subr.mxu0 0.0
    %667 = vmatpush1.msra.mxu0 0.0
    %668 = vmatprep.subr.mxu0 0.0
    %669 = vmatpush1.msra.mxu0 0.0
    %670 = vmatprep.subr.mxu0 %v549
    %671 = vmatpush1.msra.mxu0 %v547
    %672 = vmatprep.subr.mxu0 0.0
    %673 = vmatpush2.msra.mxu0 0.0
    %674 = vmatprep.subr.mxu0 0.0
    %675 = vmatpush2.msra.mxu0 0.0
    %676 = vmatprep.subr.mxu0 0.0
    %677 = vmatpush2.msra.mxu0 0.0
    %678 = vmatprep.subr.mxu0 0.0
    %679 = vmatpush2.msra.mxu0 0.0
    %680 = vmatprep.subr.mxu0 0.0
    %681 = vmatpush2.msra.mxu0 0.0
    %682 = vmatprep.subr.mxu0 0.0
    %683 = vmatpush2.msra.mxu0 0.0
    %684 = vmatprep.subr.mxu0 0.0
    %685 = vmatpush2.msra.mxu0 0.0
    %686 = vmatprep.subr.mxu0 0.0
    %687 = vmatpush2.msra.mxu0 0.0
    %688 = vmatprep.subr.mxu0 0.0
    %689 = vmatpush2.msra.mxu0 0.0
    %690 = vmatprep.subr.mxu0 0.0
    %691 = vmatpush2.msra.mxu0 0.0
    %692 = vmatprep.subr.mxu0 0.0
    %693 = vmatpush2.msra.mxu0 0.0
    %694 = vmatprep.subr.mxu0 0.0
    %695 = vmatpush2.msra.mxu0 0.0
    %696 = vmatprep.subr.mxu0 0.0
    %697 = vmatpush2.msra.mxu0 0.0
    %698 = vmatprep.subr.mxu0 0.0
    %699 = vmatpush2.msra.mxu0 0.0
    %700 = vmatprep.subr.mxu0 0.0
    %701 = vmatpush2.msra.mxu0 0.0
    %702 = vmatprep.subr.mxu0 0.0
    %703 = vmatpush2.msra.mxu0 0.0
    %704 = vmatprep.mubr.f32.mxu0 0.0
    %705 = vmatmul.mubr.f32.gmra.mxu0 %v104
    %v706 = vpop.f32.mrf.mxu0
    %v707 = vadd.f32 %v522, %v706
    %v708 = vpop.f32.mrf.mxu0
    %v709 = vadd.f32 %v522, %v708
    %710 = vmatprep.mubr.f32.mxu0 0.0
    %711 = vmatmul.mubr.f32.gmra.mxu0 %v107
    %v712 = vpop.f32.mrf.mxu0
    %v713 = vadd.f32 %v527, %v712
    %v714 = vpop.f32.mrf.mxu0
    %v715 = vadd.f32 %v527, %v714
    %716 = vmatprep.mubr.f32.mxu0 0.0
    %717 = vmatmul.mubr.f32.gmra.mxu0 %v110
    %v718 = vpop.f32.mrf.mxu0
    %v719 = vadd.f32 %v532, %v718
    %v720 = vpop.f32.mrf.mxu0
    %v721 = vadd.f32 %v532, %v720
    %722 = vmatprep.mubr.f32.mxu0 0.0
    %723 = vmatmul.mubr.f32.gmra.mxu0 %v113
    %v724 = vpop.f32.mrf.mxu0
    %v725 = vadd.f32 %v537, %v724
    %v726 = vpop.f32.mrf.mxu0
    %v727 = vadd.f32 %v537, %v726
    %728 = vdwg.mxu0
    %v729 = vmax.f32 %v618, 0.0
    %v730 = vmax.f32 %v620, 0.0
    %v731 = vmax.f32 %v707, 0.0
    %v732 = vmax.f32 %v709, 0.0
    %v733 = vmax.f32 %v624, 0.0
    %v734 = vmax.f32 %v626, 0.0
    %v735 = vmax.f32 %v713, 0.0
    %v736 = vmax.f32 %v715, 0.0
    %v737 = vmax.f32 %v630, 0.0
    %v738 = vmax.f32 %v632, 0.0
    %v739 = vmax.f32 %v719, 0.0
    %v740 = vmax.f32 %v721, 0.0
    %v741 = vmax.f32 %v636, 0.0
    %v742 = vmax.f32 %v638, 0.0
    %v743 = vmax.f32 %v725, 0.0
    %v744 = vmax.f32 %v727, 0.0
    %745 = vmatprep.subr.mxu0 0.0
    %746 = vmatpush1.msra.mxu0 0.0
    %747 = vmatprep.subr.mxu0 0.0
    %748 = vmatpush1.msra.mxu0 0.0
    %749 = vmatprep.subr.mxu0 0.0
    %750 = vmatpush1.msra.mxu0 0.0
    %751 = vmatprep.subr.mxu0 0.0
    %752 = vmatpush1.msra.mxu0 0.0
    %753 = vmatprep.subr.mxu0 0.0
    %754 = vmatpush1.msra.mxu0 0.0
    %755 = vmatprep.subr.mxu0 0.0
    %756 = vmatpush1.msra.mxu0 0.0
    %757 = vmatprep.subr.mxu0 0.0
    %758 = vmatpush1.msra.mxu0 0.0
    %759 = vmatprep.subr.mxu0 0.0
    %760 = vmatpush1.msra.mxu0 0.0
    %761 = vmatprep.subr.mxu0 0.0
    %762 = vmatpush1.msra.mxu0 0.0
    %763 = vmatprep.subr.mxu0 0.0
    %764 = vmatpush1.msra.mxu0 0.0
    %765 = vmatprep.subr.mxu0 0.0
    %766 = vmatpush1.msra.mxu0 0.0
    %767 = vmatprep.subr.mxu0 0.0
    %768 = vmatpush1.msra.mxu0 0.0
    %769 = vmatprep.subr.mxu0 %v742
    %770 = vmatpush1.msra.mxu0 %v741
    %771 = vmatprep.subr.mxu0 %v738
    %772 = vmatpush1.msra.mxu0 %v737
    %773 = vmatprep.subr.mxu0 %v734
    %774 = vmatpush1.msra.mxu0 %v733
    %775 = vmatprep.subr.mxu0 %v730
    %776 = vmatpush1.msra.mxu0 %v729
    %777 = vmatprep.subr.mxu0 0.0
    %778 = vmatpush2.msra.mxu0 0.0
    %779 = vmatprep.subr.mxu0 0.0
    %780 = vmatpush2.msra.mxu0 0.0
    %781 = vmatprep.subr.mxu0 0.0
    %782 = vmatpush2.msra.mxu0 0.0
    %783 = vmatprep.subr.mxu0 0.0
    %784 = vmatpush2.msra.mxu0 0.0
    %785 = vmatprep.subr.mxu0 0.0
    %786 = vmatpush2.msra.mxu0 0.0
    %787 = vmatprep.subr.mxu0 0.0
    %788 = vmatpush2.msra.mxu0 0.0
    %789 = vmatprep.subr.mxu0 0.0
    %790 = vmatpush2.msra.mxu0 0.0
    %791 = vmatprep.subr.mxu0 0.0
    %792 = vmatpush2.msra.mxu0 0.0
    %793 = vmatprep.subr.mxu0 0.0
    %794 = vmatpush2.msra.mxu0 0.0
    %795 = vmatprep.subr.mxu0 0.0
    %796 = vmatpush2.msra.mxu0 0.0
    %797 = vmatprep.subr.mxu0 0.0
    %798 = vmatpush2.msra.mxu0 0.0
    %799 = vmatprep.subr.mxu0 0.0
    %800 = vmatpush2.msra.mxu0 0.0
    %801 = vmatprep.subr.mxu0 0.0
    %802 = vmatpush2.msra.mxu0 0.0
    %803 = vmatprep.subr.mxu0 0.0
    %804 = vmatpush2.msra.mxu0 0.0
    %805 = vmatprep.subr.mxu0 0.0
    %806 = vmatpush2.msra.mxu0 0.0
    %807 = vmatprep.subr.mxu0 0.0
    %808 = vmatpush2.msra.mxu0 0.0
    %809 = vmatprep.mubr.f32.mxu0 0.0
    %810 = vmatmul.mubr.f32.gmra.mxu0 %v327
    %v811 = vpop.f32.mrf.mxu0
    %v812 = vadd.f32 %v323, %v811
    %v813 = vpop.f32.mrf.mxu0
    %v814 = vadd.f32 %v323, %v813
    %815 = vdwg.mxu0
    %816 = vmatprep.subr.mxu0 0.0
    %817 = vmatpush1.msra.mxu0 0.0
    %818 = vmatprep.subr.mxu0 0.0
    %819 = vmatpush1.msra.mxu0 0.0
    %820 = vmatprep.subr.mxu0 0.0
    %821 = vmatpush1.msra.mxu0 0.0
    %822 = vmatprep.subr.mxu0 0.0
    %823 = vmatpush1.msra.mxu0 0.0
    %824 = vmatprep.subr.mxu0 0.0
    %825 = vmatpush1.msra.mxu0 0.0
    %826 = vmatprep.subr.mxu0 0.0
    %827 = vmatpush1.msra.mxu0 0.0
    %828 = vmatprep.subr.mxu0 0.0
    %829 = vmatpush1.msra.mxu0 0.0
    %830 = vmatprep.subr.mxu0 0.0
    %831 = vmatpush1.msra.mxu0 0.0
    %832 = vmatprep.subr.mxu0 0.0
    %833 = vmatpush1.msra.mxu0 0.0
    %834 = vmatprep.subr.mxu0 0.0
    %835 = vmatpush1.msra.mxu0 0.0
    %836 = vmatprep.subr.mxu0 0.0
    %837 = vmatpush1.msra.mxu0 0.0
    %838 = vmatprep.subr.mxu0 0.0
    %839 = vmatpush1.msra.mxu0 0.0
    %840 = vmatprep.subr.mxu0 %v744
    %841 = vmatpush1.msra.mxu0 %v743
    %842 = vmatprep.subr.mxu0 %v740
    %843 = vmatpush1.msra.mxu0 %v739
    %844 = vmatprep.subr.mxu0 %v736
    %845 = vmatpush1.msra.mxu0 %v735
    %846 = vmatprep.subr.mxu0 %v732
    %847 = vmatpush1.msra.mxu0 %v731
    %848 = vmatprep.subr.mxu0 0.0
    %849 = vmatpush2.msra.mxu0 0.0
    %850 = vmatprep.subr.mxu0 0.0
    %851 = vmatpush2.msra.mxu0 0.0
    %852 = vmatprep.subr.mxu0 0.0
    %853 = vmatpush2.msra.mxu0 0.0
    %854 = vmatprep.subr.mxu0 0.0
    %855 = vmatpush2.msra.mxu0 0.0
    %856 = vmatprep.subr.mxu0 0.0
    %857 = vmatpush2.msra.mxu0 0.0
    %858 = vmatprep.subr.mxu0 0.0
    %859 = vmatpush2.msra.mxu0 0.0
    %860 = vmatprep.subr.mxu0 0.0
    %861 = vmatpush2.msra.mxu0 0.0
    %862 = vmatprep.subr.mxu0 0.0
    %863 = vmatpush2.msra.mxu0 0.0
    %864 = vmatprep.subr.mxu0 0.0
    %865 = vmatpush2.msra.mxu0 0.0
    %866 = vmatprep.subr.mxu0 0.0
    %867 = vmatpush2.msra.mxu0 0.0
    %868 = vmatprep.subr.mxu0 0.0
    %869 = vmatpush2.msra.mxu0 0.0
    %870 = vmatprep.subr.mxu0 0.0
    %871 = vmatpush2.msra.mxu0 0.0
    %872 = vmatprep.subr.mxu0 0.0
    %873 = vmatpush2.msra.mxu0 0.0
    %874 = vmatprep.subr.mxu0 0.0
    %875 = vmatpush2.msra.mxu0 0.0
    %876 = vmatprep.subr.mxu0 0.0
    %877 = vmatpush2.msra.mxu0 0.0
    %878 = vmatprep.subr.mxu0 0.0
    %879 = vmatpush2.msra.mxu0 0.0
    %880 = vmatprep.mubr.f32.mxu0 0.0
    %881 = vmatmul.mubr.f32.gmra.mxu0 %v327
    %v882 = vpop.f32.mrf.mxu0
    %v883 = vadd.f32 %v323, %v882
    %v884 = vpop.f32.mrf.mxu0
    %v885 = vadd.f32 %v323, %v884
    %886 = vdwg.mxu0
    %v887 = vstv %s511
    %v888 = vmul.f32 %v887, %v812
    %v889 = vmul.f32 %v887, %v814
    %v890 = vmul.f32 %v887, %v883
    %v891 = vmul.f32 %v887, %v885
    %v896 = vcombine.low %v888, %v889
    %v897 = vcombine.low %v890, %v891
    %v900 = vsub.f32 %v509, %v896
    %v901 = vsub.f32 %v510, %v897
    %v902 = vstv %s512
    %v903 = vmul.f32 %v900, %v902
    %v904 = vmul.f32 %v901, %v902
    %v905 = vmax.f32 %v903, -1.0
    %v906 = vmax.f32 %v904, -1.0
    %v907 = vmin.f32 %v905, 1.0
    %v908 = vmin.f32 %v906, 1.0
    %v909 = vstv %s513
    %v910 = vmul.f32 %v909, %v907
    %v911 = vmul.f32 %v909, %v908
    %v912 = vstv %s514
    %v913 = vmul.f32 %v912, %v812
    %v914 = vmul.f32 %v912, %v814
    %v915 = vmul.f32 %v912, %v883
    %v916 = vmul.f32 %v912, %v885
    %v921 = vcombine.low %v913, %v914
    %v922 = vcombine.low %v915, %v916
    %v925 = vadd.f32 %v910, %v921
    %v926 = vadd.f32 %v911, %v922
    %s927 = sld [smem:[#allocation2 + $0xa]]
    %s928 = sld [smem:[#allocation2 + $0xb]]
    %s929 = sld [smem:[#allocation2 + $0xc]]
    %s930 = sld [smem:[#allocation2 + $0xd]]
    %v931 = vld [vmem:[%s3] sm:$0xff]
    %v932 = vld [vmem:[%s3 + $0x8] sm:$0xff]
    %v933 = vld [vmem:[%s3 + $0x10] sm:$0xff]
    %v934 = vld [vmem:[%s3 + $0x18] sm:$0xff]
    %936 = vset.pattern.permute.xlu0 2
    %937 = vperm.xlu0 %936, %v931
    %v938 = vpop.permute.xlu0 %937
    %941 = vset.pattern.permute.xlu0 2
    %942 = vperm.xlu0 %941, %v932
    %v943 = vpop.permute.xlu0 %942
    %946 = vset.pattern.permute.xlu0 2
    %947 = vperm.xlu0 %946, %v933
    %v948 = vpop.permute.xlu0 %947
    %951 = vset.pattern.permute.xlu0 2
    %952 = vperm.xlu0 %951, %v934
    %v953 = vpop.permute.xlu0 %952
    %v957 = vcombine.high %v925, %v925
    %v958 = vcombine.high %v926, %v926
    %v959 = vsel %vm115, %v925, 0
    %v961 = vsel %vm115, %v957, 0
    %v963 = vsel %vm115, %v926, 0
    %v965 = vsel %vm115, %v958, 0
    %967 = vmatprep.subr.mxu0 0.0
    %968 = vmatpush1.msra.mxu0 0.0
    %969 = vmatprep.subr.mxu0 0.0
    %970 = vmatpush1.msra.mxu0 0.0
    %971 = vmatprep.subr.mxu0 0.0
    %972 = vmatpush1.msra.mxu0 0.0
    %973 = vmatprep.subr.mxu0 0.0
    %974 = vmatpush1.msra.mxu0 0.0
    %975 = vmatprep.subr.mxu0 0.0
    %976 = vmatpush1.msra.mxu0 0.0
    %977 = vmatprep.subr.mxu0 0.0
    %978 = vmatpush1.msra.mxu0 0.0
    %979 = vmatprep.subr.mxu0 0.0
    %980 = vmatpush1.msra.mxu0 0.0
    %981 = vmatprep.subr.mxu0 0.0
    %982 = vmatpush1.msra.mxu0 0.0
    %983 = vmatprep.subr.mxu0 0.0
    %984 = vmatpush1.msra.mxu0 0.0
    %985 = vmatprep.subr.mxu0 0.0
    %986 = vmatpush1.msra.mxu0 0.0
    %987 = vmatprep.subr.mxu0 0.0
    %988 = vmatpush1.msra.mxu0 0.0
    %989 = vmatprep.subr.mxu0 0.0
    %990 = vmatpush1.msra.mxu0 0.0
    %991 = vmatprep.subr.mxu0 0.0
    %992 = vmatpush1.msra.mxu0 0.0
    %993 = vmatprep.subr.mxu0 0.0
    %994 = vmatpush1.msra.mxu0 0.0
    %995 = vmatprep.subr.mxu0 0.0
    %996 = vmatpush1.msra.mxu0 0.0
    %997 = vmatprep.subr.mxu0 %v961
    %998 = vmatpush1.msra.mxu0 %v959
    %999 = vmatprep.subr.mxu0 0.0
    %1000 = vmatpush2.msra.mxu0 0.0
    %1001 = vmatprep.subr.mxu0 0.0
    %1002 = vmatpush2.msra.mxu0 0.0
    %1003 = vmatprep.subr.mxu0 0.0
    %1004 = vmatpush2.msra.mxu0 0.0
    %1005 = vmatprep.subr.mxu0 0.0
    %1006 = vmatpush2.msra.mxu0 0.0
    %1007 = vmatprep.subr.mxu0 0.0
    %1008 = vmatpush2.msra.mxu0 0.0
    %1009 = vmatprep.subr.mxu0 0.0
    %1010 = vmatpush2.msra.mxu0 0.0
    %1011 = vmatprep.subr.mxu0 0.0
    %1012 = vmatpush2.msra.mxu0 0.0
    %1013 = vmatprep.subr.mxu0 0.0
    %1014 = vmatpush2.msra.mxu0 0.0
    %1015 = vmatprep.subr.mxu0 0.0
    %1016 = vmatpush2.msra.mxu0 0.0
    %1017 = vmatprep.subr.mxu0 0.0
    %1018 = vmatpush2.msra.mxu0 0.0
    %1019 = vmatprep.subr.mxu0 0.0
    %1020 = vmatpush2.msra.mxu0 0.0
    %1021 = vmatprep.subr.mxu0 0.0
    %1022 = vmatpush2.msra.mxu0 0.0
    %1023 = vmatprep.subr.mxu0 0.0
    %1024 = vmatpush2.msra.mxu0 0.0
    %1025 = vmatprep.subr.mxu0 0.0
    %1026 = vmatpush2.msra.mxu0 0.0
    %1027 = vmatprep.subr.mxu0 0.0
    %1028 = vmatpush2.msra.mxu0 0.0
    %1029 = vmatprep.subr.mxu0 0.0
    %1030 = vmatpush2.msra.mxu0 0.0
    %1031 = vmatprep.mubr.f32.mxu0 0.0
    %1032 = vmatmul.mubr.f32.gmra.mxu0 %v104
    %v1033 = vpop.f32.mrf.mxu0
    %v1034 = vadd.f32 %v938, %v1033
    %v1035 = vpop.f32.mrf.mxu0
    %v1036 = vadd.f32 %v938, %v1035
    %1037 = vmatprep.mubr.f32.mxu0 0.0
    %1038 = vmatmul.mubr.f32.gmra.mxu0 %v107
    %v1039 = vpop.f32.mrf.mxu0
    %v1040 = vadd.f32 %v943, %v1039
    %v1041 = vpop.f32.mrf.mxu0
    %v1042 = vadd.f32 %v943, %v1041
    %1043 = vmatprep.mubr.f32.mxu0 0.0
    %1044 = vmatmul.mubr.f32.gmra.mxu0 %v110
    %v1045 = vpop.f32.mrf.mxu0
    %v1046 = vadd.f32 %v948, %v1045
    %v1047 = vpop.f32.mrf.mxu0
    %v1048 = vadd.f32 %v948, %v1047
    %1049 = vmatprep.mubr.f32.mxu0 0.0
    %1050 = vmatmul.mubr.f32.gmra.mxu0 %v113
    %v1051 = vpop.f32.mrf.mxu0
    %v1052 = vadd.f32 %v953, %v1051
    %v1053 = vpop.f32.mrf.mxu0
    %v1054 = vadd.f32 %v953, %v1053
    %1055 = vdwg.mxu0
    %1056 = vmatprep.subr.mxu0 0.0
    %1057 = vmatpush1.msra.mxu0 0.0
    %1058 = vmatprep.subr.mxu0 0.0
    %1059 = vmatpush1.msra.mxu0 0.0
    %1060 = vmatprep.subr.mxu0 0.0
    %1061 = vmatpush1.msra.mxu0 0.0
    %1062 = vmatprep.subr.mxu0 0.0
    %1063 = vmatpush1.msra.mxu0 0.0
    %1064 = vmatprep.subr.mxu0 0.0
    %1065 = vmatpush1.msra.mxu0 0.0
    %1066 = vmatprep.subr.mxu0 0.0
    %1067 = vmatpush1.msra.mxu0 0.0
    %1068 = vmatprep.subr.mxu0 0.0
    %1069 = vmatpush1.msra.mxu0 0.0
    %1070 = vmatprep.subr.mxu0 0.0
    %1071 = vmatpush1.msra.mxu0 0.0
    %1072 = vmatprep.subr.mxu0 0.0
    %1073 = vmatpush1.msra.mxu0 0.0
    %1074 = vmatprep.subr.mxu0 0.0
    %1075 = vmatpush1.msra.mxu0 0.0
    %1076 = vmatprep.subr.mxu0 0.0
    %1077 = vmatpush1.msra.mxu0 0.0
    %1078 = vmatprep.subr.mxu0 0.0
    %1079 = vmatpush1.msra.mxu0 0.0
    %1080 = vmatprep.subr.mxu0 0.0
    %1081 = vmatpush1.msra.mxu0 0.0
    %1082 = vmatprep.subr.mxu0 0.0
    %1083 = vmatpush1.msra.mxu0 0.0
    %1084 = vmatprep.subr.mxu0 0.0
    %1085 = vmatpush1.msra.mxu0 0.0
    %1086 = vmatprep.subr.mxu0 %v965
    %1087 = vmatpush1.msra.mxu0 %v963
    %1088 = vmatprep.subr.mxu0 0.0
    %1089 = vmatpush2.msra.mxu0 0.0
    %1090 = vmatprep.subr.mxu0 0.0
    %1091 = vmatpush2.msra.mxu0 0.0
    %1092 = vmatprep.subr.mxu0 0.0
    %1093 = vmatpush2.msra.mxu0 0.0
    %1094 = vmatprep.subr.mxu0 0.0
    %1095 = vmatpush2.msra.mxu0 0.0
    %1096 = vmatprep.subr.mxu0 0.0
    %1097 = vmatpush2.msra.mxu0 0.0
    %1098 = vmatprep.subr.mxu0 0.0
    %1099 = vmatpush2.msra.mxu0 0.0
    %1100 = vmatprep.subr.mxu0 0.0
    %1101 = vmatpush2.msra.mxu0 0.0
    %1102 = vmatprep.subr.mxu0 0.0
    %1103 = vmatpush2.msra.mxu0 0.0
    %1104 = vmatprep.subr.mxu0 0.0
    %1105 = vmatpush2.msra.mxu0 0.0
    %1106 = vmatprep.subr.mxu0 0.0
    %1107 = vmatpush2.msra.mxu0 0.0
    %1108 = vmatprep.subr.mxu0 0.0
    %1109 = vmatpush2.msra.mxu0 0.0
    %1110 = vmatprep.subr.mxu0 0.0
    %1111 = vmatpush2.msra.mxu0 0.0
    %1112 = vmatprep.subr.mxu0 0.0
    %1113 = vmatpush2.msra.mxu0 0.0
    %1114 = vmatprep.subr.mxu0 0.0
    %1115 = vmatpush2.msra.mxu0 0.0
    %1116 = vmatprep.subr.mxu0 0.0
    %1117 = vmatpush2.msra.mxu0 0.0
    %1118 = vmatprep.subr.mxu0 0.0
    %1119 = vmatpush2.msra.mxu0 0.0
    %1120 = vmatprep.mubr.f32.mxu0 0.0
    %1121 = vmatmul.mubr.f32.gmra.mxu0 %v104
    %v1122 = vpop.f32.mrf.mxu0
    %v1123 = vadd.f32 %v938, %v1122
    %v1124 = vpop.f32.mrf.mxu0
    %v1125 = vadd.f32 %v938, %v1124
    %1126 = vmatprep.mubr.f32.mxu0 0.0
    %1127 = vmatmul.mubr.f32.gmra.mxu0 %v107
    %v1128 = vpop.f32.mrf.mxu0
    %v1129 = vadd.f32 %v943, %v1128
    %v1130 = vpop.f32.mrf.mxu0
    %v1131 = vadd.f32 %v943, %v1130
    %1132 = vmatprep.mubr.f32.mxu0 0.0
    %1133 = vmatmul.mubr.f32.gmra.mxu0 %v110
    %v1134 = vpop.f32.mrf.mxu0
    %v1135 = vadd.f32 %v948, %v1134
    %v1136 = vpop.f32.mrf.mxu0
    %v1137 = vadd.f32 %v948, %v1136
    %1138 = vmatprep.mubr.f32.mxu0 0.0
    %1139 = vmatmul.mubr.f32.gmra.mxu0 %v113
    %v1140 = vpop.f32.mrf.mxu0
    %v1141 = vadd.f32 %v953, %v1140
    %v1142 = vpop.f32.mrf.mxu0
    %v1143 = vadd.f32 %v953, %v1142
    %1144 = vdwg.mxu0
    %v1145 = vmax.f32 %v1034, 0.0
    %v1146 = vmax.f32 %v1036, 0.0
    %v1147 = vmax.f32 %v1123, 0.0
    %v1148 = vmax.f32 %v1125, 0.0
    %v1149 = vmax.f32 %v1040, 0.0
    %v1150 = vmax.f32 %v1042, 0.0
    %v1151 = vmax.f32 %v1129, 0.0
    %v1152 = vmax.f32 %v1131, 0.0
    %v1153 = vmax.f32 %v1046, 0.0
    %v1154 = vmax.f32 %v1048, 0.0
    %v1155 = vmax.f32 %v1135, 0.0
    %v1156 = vmax.f32 %v1137, 0.0
    %v1157 = vmax.f32 %v1052, 0.0
    %v1158 = vmax.f32 %v1054, 0.0
    %v1159 = vmax.f32 %v1141, 0.0
    %v1160 = vmax.f32 %v1143, 0.0
    %1161 = vmatprep.subr.mxu0 0.0
    %1162 = vmatpush1.msra.mxu0 0.0
    %1163 = vmatprep.subr.mxu0 0.0
    %1164 = vmatpush1.msra.mxu0 0.0
    %1165 = vmatprep.subr.mxu0 0.0
    %1166 = vmatpush1.msra.mxu0 0.0
    %1167 = vmatprep.subr.mxu0 0.0
    %1168 = vmatpush1.msra.mxu0 0.0
    %1169 = vmatprep.subr.mxu0 0.0
    %1170 = vmatpush1.msra.mxu0 0.0
    %1171 = vmatprep.subr.mxu0 0.0
    %1172 = vmatpush1.msra.mxu0 0.0
    %1173 = vmatprep.subr.mxu0 0.0
    %1174 = vmatpush1.msra.mxu0 0.0
    %1175 = vmatprep.subr.mxu0 0.0
    %1176 = vmatpush1.msra.mxu0 0.0
    %1177 = vmatprep.subr.mxu0 0.0
    %1178 = vmatpush1.msra.mxu0 0.0
    %1179 = vmatprep.subr.mxu0 0.0
    %1180 = vmatpush1.msra.mxu0 0.0
    %1181 = vmatprep.subr.mxu0 0.0
    %1182 = vmatpush1.msra.mxu0 0.0
    %1183 = vmatprep.subr.mxu0 0.0
    %1184 = vmatpush1.msra.mxu0 0.0
    %1185 = vmatprep.subr.mxu0 %v1158
    %1186 = vmatpush1.msra.mxu0 %v1157
    %1187 = vmatprep.subr.mxu0 %v1154
    %1188 = vmatpush1.msra.mxu0 %v1153
    %1189 = vmatprep.subr.mxu0 %v1150
    %1190 = vmatpush1.msra.mxu0 %v1149
    %1191 = vmatprep.subr.mxu0 %v1146
    %1192 = vmatpush1.msra.mxu0 %v1145
    %1193 = vmatprep.subr.mxu0 0.0
    %1194 = vmatpush2.msra.mxu0 0.0
    %1195 = vmatprep.subr.mxu0 0.0
    %1196 = vmatpush2.msra.mxu0 0.0
    %1197 = vmatprep.subr.mxu0 0.0
    %1198 = vmatpush2.msra.mxu0 0.0
    %1199 = vmatprep.subr.mxu0 0.0
    %1200 = vmatpush2.msra.mxu0 0.0
    %1201 = vmatprep.subr.mxu0 0.0
    %1202 = vmatpush2.msra.mxu0 0.0
    %1203 = vmatprep.subr.mxu0 0.0
    %1204 = vmatpush2.msra.mxu0 0.0
    %1205 = vmatprep.subr.mxu0 0.0
    %1206 = vmatpush2.msra.mxu0 0.0
    %1207 = vmatprep.subr.mxu0 0.0
    %1208 = vmatpush2.msra.mxu0 0.0
    %1209 = vmatprep.subr.mxu0 0.0
    %1210 = vmatpush2.msra.mxu0 0.0
    %1211 = vmatprep.subr.mxu0 0.0
    %1212 = vmatpush2.msra.mxu0 0.0
    %1213 = vmatprep.subr.mxu0 0.0
    %1214 = vmatpush2.msra.mxu0 0.0
    %1215 = vmatprep.subr.mxu0 0.0
    %1216 = vmatpush2.msra.mxu0 0.0
    %1217 = vmatprep.subr.mxu0 0.0
    %1218 = vmatpush2.msra.mxu0 0.0
    %1219 = vmatprep.subr.mxu0 0.0
    %1220 = vmatpush2.msra.mxu0 0.0
    %1221 = vmatprep.subr.mxu0 0.0
    %1222 = vmatpush2.msra.mxu0 0.0
    %1223 = vmatprep.subr.mxu0 0.0
    %1224 = vmatpush2.msra.mxu0 0.0
    %1225 = vmatprep.mubr.f32.mxu0 0.0
    %1226 = vmatmul.mubr.f32.gmra.mxu0 %v327
    %v1227 = vpop.f32.mrf.mxu0
    %v1228 = vadd.f32 %v323, %v1227
    %v1229 = vpop.f32.mrf.mxu0
    %v1230 = vadd.f32 %v323, %v1229
    %1231 = vdwg.mxu0
    %1232 = vmatprep.subr.mxu0 0.0
    %1233 = vmatpush1.msra.mxu0 0.0
    %1234 = vmatprep.subr.mxu0 0.0
    %1235 = vmatpush1.msra.mxu0 0.0
    %1236 = vmatprep.subr.mxu0 0.0
    %1237 = vmatpush1.msra.mxu0 0.0
    %1238 = vmatprep.subr.mxu0 0.0
    %1239 = vmatpush1.msra.mxu0 0.0
    %1240 = vmatprep.subr.mxu0 0.0
    %1241 = vmatpush1.msra.mxu0 0.0
    %1242 = vmatprep.subr.mxu0 0.0
    %1243 = vmatpush1.msra.mxu0 0.0
    %1244 = vmatprep.subr.mxu0 0.0
    %1245 = vmatpush1.msra.mxu0 0.0
    %1246 = vmatprep.subr.mxu0 0.0
    %1247 = vmatpush1.msra.mxu0 0.0
    %1248 = vmatprep.subr.mxu0 0.0
    %1249 = vmatpush1.msra.mxu0 0.0
    %1250 = vmatprep.subr.mxu0 0.0
    %1251 = vmatpush1.msra.mxu0 0.0
    %1252 = vmatprep.subr.mxu0 0.0
    %1253 = vmatpush1.msra.mxu0 0.0
    %1254 = vmatprep.subr.mxu0 0.0
    %1255 = vmatpush1.msra.mxu0 0.0
    %1256 = vmatprep.subr.mxu0 %v1160
    %1257 = vmatpush1.msra.mxu0 %v1159
    %1258 = vmatprep.subr.mxu0 %v1156
    %1259 = vmatpush1.msra.mxu0 %v1155
    %1260 = vmatprep.subr.mxu0 %v1152
    %1261 = vmatpush1.msra.mxu0 %v1151
    %1262 = vmatprep.subr.mxu0 %v1148
    %1263 = vmatpush1.msra.mxu0 %v1147
    %1264 = vmatprep.subr.mxu0 0.0
    %1265 = vmatpush2.msra.mxu0 0.0
    %1266 = vmatprep.subr.mxu0 0.0
    %1267 = vmatpush2.msra.mxu0 0.0
    %1268 = vmatprep.subr.mxu0 0.0
    %1269 = vmatpush2.msra.mxu0 0.0
    %1270 = vmatprep.subr.mxu0 0.0
    %1271 = vmatpush2.msra.mxu0 0.0
    %1272 = vmatprep.subr.mxu0 0.0
    %1273 = vmatpush2.msra.mxu0 0.0
    %1274 = vmatprep.subr.mxu0 0.0
    %1275 = vmatpush2.msra.mxu0 0.0
    %1276 = vmatprep.subr.mxu0 0.0
    %1277 = vmatpush2.msra.mxu0 0.0
    %1278 = vmatprep.subr.mxu0 0.0
    %1279 = vmatpush2.msra.mxu0 0.0
    %1280 = vmatprep.subr.mxu0 0.0
    %1281 = vmatpush2.msra.mxu0 0.0
    %1282 = vmatprep.subr.mxu0 0.0
    %1283 = vmatpush2.msra.mxu0 0.0
    %1284 = vmatprep.subr.mxu0 0.0
    %1285 = vmatpush2.msra.mxu0 0.0
    %1286 = vmatprep.subr.mxu0 0.0
    %1287 = vmatpush2.msra.mxu0 0.0
    %1288 = vmatprep.subr.mxu0 0.0
    %1289 = vmatpush2.msra.mxu0 0.0
    %1290 = vmatprep.subr.mxu0 0.0
    %1291 = vmatpush2.msra.mxu0 0.0
    %1292 = vmatprep.subr.mxu0 0.0
    %1293 = vmatpush2.msra.mxu0 0.0
    %1294 = vmatprep.subr.mxu0 0.0
    %1295 = vmatpush2.msra.mxu0 0.0
    %1296 = vmatprep.mubr.f32.mxu0 0.0
    %1297 = vmatmul.mubr.f32.gmra.mxu0 %v327
    %v1298 = vpop.f32.mrf.mxu0
    %v1299 = vadd.f32 %v323, %v1298
    %v1300 = vpop.f32.mrf.mxu0
    %v1301 = vadd.f32 %v323, %v1300
    %1302 = vdwg.mxu0
    %v1303 = vstv %s927
    %v1304 = vmul.f32 %v1303, %v1228
    %v1305 = vmul.f32 %v1303, %v1230
    %v1306 = vmul.f32 %v1303, %v1299
    %v1307 = vmul.f32 %v1303, %v1301
    %v1312 = vcombine.low %v1304, %v1305
    %v1313 = vcombine.low %v1306, %v1307
    %v1316 = vsub.f32 %v925, %v1312
    %v1317 = vsub.f32 %v926, %v1313
    %v1318 = vstv %s928
    %v1319 = vmul.f32 %v1316, %v1318
    %v1320 = vmul.f32 %v1317, %v1318
    %v1321 = vmax.f32 %v1319, -1.0
    %v1322 = vmax.f32 %v1320, -1.0
    %v1323 = vmin.f32 %v1321, 1.0
    %v1324 = vmin.f32 %v1322, 1.0
    %v1325 = vstv %s929
    %v1326 = vmul.f32 %v1325, %v1323
    %v1327 = vmul.f32 %v1325, %v1324
    %v1328 = vstv %s930
    %v1329 = vmul.f32 %v1328, %v1228
    %v1330 = vmul.f32 %v1328, %v1230
    %v1331 = vmul.f32 %v1328, %v1299
    %v1332 = vmul.f32 %v1328, %v1301
    %v1337 = vcombine.low %v1329, %v1330
    %v1338 = vcombine.low %v1331, %v1332
    %v1341 = vadd.f32 %v1326, %v1337
    %v1342 = vadd.f32 %v1327, %v1338
    %s1343 = sld [smem:[#allocation2 + $0xe]]
    %s1344 = sld [smem:[#allocation2 + $0xf]]
    %s1345 = sld [smem:[#allocation2 + $0x10]]
    %s1346 = sld [smem:[#allocation2 + $0x11]]
    %v1347 = vld [vmem:[%s3] sm:$0xff]
    %v1348 = vld [vmem:[%s3 + $0x8] sm:$0xff]
    %v1349 = vld [vmem:[%s3 + $0x10] sm:$0xff]
    %v1350 = vld [vmem:[%s3 + $0x18] sm:$0xff]
    %1352 = vset.pattern.permute.xlu0 3
    %1353 = vperm.xlu0 %1352, %v1347
    %v1354 = vpop.permute.xlu0 %1353
    %1357 = vset.pattern.permute.xlu0 3
    %1358 = vperm.xlu0 %1357, %v1348
    %v1359 = vpop.permute.xlu0 %1358
    %1362 = vset.pattern.permute.xlu0 3
    %1363 = vperm.xlu0 %1362, %v1349
    %v1364 = vpop.permute.xlu0 %1363
    %1367 = vset.pattern.permute.xlu0 3
    %1368 = vperm.xlu0 %1367, %v1350
    %v1369 = vpop.permute.xlu0 %1368
    %v1373 = vcombine.high %v1341, %v1341
    %v1374 = vcombine.high %v1342, %v1342
    %v1375 = vsel %vm115, %v1341, 0
    %v1377 = vsel %vm115, %v1373, 0
    %v1379 = vsel %vm115, %v1342, 0
    %v1381 = vsel %vm115, %v1374, 0
    %1383 = vmatprep.subr.mxu0 0.0
    %1384 = vmatpush1.msra.mxu0 0.0
    %1385 = vmatprep.subr.mxu0 0.0
    %1386 = vmatpush1.msra.mxu0 0.0
    %1387 = vmatprep.subr.mxu0 0.0
    %1388 = vmatpush1.msra.mxu0 0.0
    %1389 = vmatprep.subr.mxu0 0.0
    %1390 = vmatpush1.msra.mxu0 0.0
    %1391 = vmatprep.subr.mxu0 0.0
    %1392 = vmatpush1.msra.mxu0 0.0
    %1393 = vmatprep.subr.mxu0 0.0
    %1394 = vmatpush1.msra.mxu0 0.0
    %1395 = vmatprep.subr.mxu0 0.0
    %1396 = vmatpush1.msra.mxu0 0.0
    %1397 = vmatprep.subr.mxu0 0.0
    %1398 = vmatpush1.msra.mxu0 0.0
    %1399 = vmatprep.subr.mxu0 0.0
    %1400 = vmatpush1.msra.mxu0 0.0
    %1401 = vmatprep.subr.mxu0 0.0
    %1402 = vmatpush1.msra.mxu0 0.0
    %1403 = vmatprep.subr.mxu0 0.0
    %1404 = vmatpush1.msra.mxu0 0.0
    %1405 = vmatprep.subr.mxu0 0.0
    %1406 = vmatpush1.msra.mxu0 0.0
    %1407 = vmatprep.subr.mxu0 0.0
    %1408 = vmatpush1.msra.mxu0 0.0
    %1409 = vmatprep.subr.mxu0 0.0
    %1410 = vmatpush1.msra.mxu0 0.0
    %1411 = vmatprep.subr.mxu0 0.0
    %1412 = vmatpush1.msra.mxu0 0.0
    %1413 = vmatprep.subr.mxu0 %v1377
    %1414 = vmatpush1.msra.mxu0 %v1375
    %1415 = vmatprep.subr.mxu0 0.0
    %1416 = vmatpush2.msra.mxu0 0.0
    %1417 = vmatprep.subr.mxu0 0.0
    %1418 = vmatpush2.msra.mxu0 0.0
    %1419 = vmatprep.subr.mxu0 0.0
    %1420 = vmatpush2.msra.mxu0 0.0
    %1421 = vmatprep.subr.mxu0 0.0
    %1422 = vmatpush2.msra.mxu0 0.0
    %1423 = vmatprep.subr.mxu0 0.0
    %1424 = vmatpush2.msra.mxu0 0.0
    %1425 = vmatprep.subr.mxu0 0.0
    %1426 = vmatpush2.msra.mxu0 0.0
    %1427 = vmatprep.subr.mxu0 0.0
    %1428 = vmatpush2.msra.mxu0 0.0
    %1429 = vmatprep.subr.mxu0 0.0
    %1430 = vmatpush2.msra.mxu0 0.0
    %1431 = vmatprep.subr.mxu0 0.0
    %1432 = vmatpush2.msra.mxu0 0.0
    %1433 = vmatprep.subr.mxu0 0.0
    %1434 = vmatpush2.msra.mxu0 0.0
    %1435 = vmatprep.subr.mxu0 0.0
    %1436 = vmatpush2.msra.mxu0 0.0
    %1437 = vmatprep.subr.mxu0 0.0
    %1438 = vmatpush2.msra.mxu0 0.0
    %1439 = vmatprep.subr.mxu0 0.0
    %1440 = vmatpush2.msra.mxu0 0.0
    %1441 = vmatprep.subr.mxu0 0.0
    %1442 = vmatpush2.msra.mxu0 0.0
    %1443 = vmatprep.subr.mxu0 0.0
    %1444 = vmatpush2.msra.mxu0 0.0
    %1445 = vmatprep.subr.mxu0 0.0
    %1446 = vmatpush2.msra.mxu0 0.0
    %1447 = vmatprep.mubr.f32.mxu0 0.0
    %1448 = vmatmul.mubr.f32.gmra.mxu0 %v104
    %v1449 = vpop.f32.mrf.mxu0
    %v1450 = vadd.f32 %v1354, %v1449
    %v1451 = vpop.f32.mrf.mxu0
    %v1452 = vadd.f32 %v1354, %v1451
    %1453 = vmatprep.mubr.f32.mxu0 0.0
    %1454 = vmatmul.mubr.f32.gmra.mxu0 %v107
    %v1455 = vpop.f32.mrf.mxu0
    %v1456 = vadd.f32 %v1359, %v1455
    %v1457 = vpop.f32.mrf.mxu0
    %v1458 = vadd.f32 %v1359, %v1457
    %1459 = vmatprep.mubr.f32.mxu0 0.0
    %1460 = vmatmul.mubr.f32.gmra.mxu0 %v110
    %v1461 = vpop.f32.mrf.mxu0
    %v1462 = vadd.f32 %v1364, %v1461
    %v1463 = vpop.f32.mrf.mxu0
    %v1464 = vadd.f32 %v1364, %v1463
    %1465 = vmatprep.mubr.f32.mxu0 0.0
    %1466 = vmatmul.mubr.f32.gmra.mxu0 %v113
    %v1467 = vpop.f32.mrf.mxu0
    %v1468 = vadd.f32 %v1369, %v1467
    %v1469 = vpop.f32.mrf.mxu0
    %v1470 = vadd.f32 %v1369, %v1469
    %1471 = vdwg.mxu0
    %1472 = vmatprep.subr.mxu0 0.0
    %1473 = vmatpush1.msra.mxu0 0.0
    %1474 = vmatprep.subr.mxu0 0.0
    %1475 = vmatpush1.msra.mxu0 0.0
    %1476 = vmatprep.subr.mxu0 0.0
    %1477 = vmatpush1.msra.mxu0 0.0
    %1478 = vmatprep.subr.mxu0 0.0
    %1479 = vmatpush1.msra.mxu0 0.0
    %1480 = vmatprep.subr.mxu0 0.0
    %1481 = vmatpush1.msra.mxu0 0.0
    %1482 = vmatprep.subr.mxu0 0.0
    %1483 = vmatpush1.msra.mxu0 0.0
    %1484 = vmatprep.subr.mxu0 0.0
    %1485 = vmatpush1.msra.mxu0 0.0
    %1486 = vmatprep.subr.mxu0 0.0
    %1487 = vmatpush1.msra.mxu0 0.0
    %1488 = vmatprep.subr.mxu0 0.0
    %1489 = vmatpush1.msra.mxu0 0.0
    %1490 = vmatprep.subr.mxu0 0.0
    %1491 = vmatpush1.msra.mxu0 0.0
    %1492 = vmatprep.subr.mxu0 0.0
    %1493 = vmatpush1.msra.mxu0 0.0
    %1494 = vmatprep.subr.mxu0 0.0
    %1495 = vmatpush1.msra.mxu0 0.0
    %1496 = vmatprep.subr.mxu0 0.0
    %1497 = vmatpush1.msra.mxu0 0.0
    %1498 = vmatprep.subr.mxu0 0.0
    %1499 = vmatpush1.msra.mxu0 0.0
    %1500 = vmatprep.subr.mxu0 0.0
    %1501 = vmatpush1.msra.mxu0 0.0
    %1502 = vmatprep.subr.mxu0 %v1381
    %1503 = vmatpush1.msra.mxu0 %v1379
    %1504 = vmatprep.subr.mxu0 0.0
    %1505 = vmatpush2.msra.mxu0 0.0
    %1506 = vmatprep.subr.mxu0 0.0
    %1507 = vmatpush2.msra.mxu0 0.0
    %1508 = vmatprep.subr.mxu0 0.0
    %1509 = vmatpush2.msra.mxu0 0.0
    %1510 = vmatprep.subr.mxu0 0.0
    %1511 = vmatpush2.msra.mxu0 0.0
    %1512 = vmatprep.subr.mxu0 0.0
    %1513 = vmatpush2.msra.mxu0 0.0
    %1514 = vmatprep.subr.mxu0 0.0
    %1515 = vmatpush2.msra.mxu0 0.0
    %1516 = vmatprep.subr.mxu0 0.0
    %1517 = vmatpush2.msra.mxu0 0.0
    %1518 = vmatprep.subr.mxu0 0.0
    %1519 = vmatpush2.msra.mxu0 0.0
    %1520 = vmatprep.subr.mxu0 0.0
    %1521 = vmatpush2.msra.mxu0 0.0
    %1522 = vmatprep.subr.mxu0 0.0
    %1523 = vmatpush2.msra.mxu0 0.0
    %1524 = vmatprep.subr.mxu0 0.0
    %1525 = vmatpush2.msra.mxu0 0.0
    %1526 = vmatprep.subr.mxu0 0.0
    %1527 = vmatpush2.msra.mxu0 0.0
    %1528 = vmatprep.subr.mxu0 0.0
    %1529 = vmatpush2.msra.mxu0 0.0
    %1530 = vmatprep.subr.mxu0 0.0
    %1531 = vmatpush2.msra.mxu0 0.0
    %1532 = vmatprep.subr.mxu0 0.0
    %1533 = vmatpush2.msra.mxu0 0.0
    %1534 = vmatprep.subr.mxu0 0.0
    %1535 = vmatpush2.msra.mxu0 0.0
    %1536 = vmatprep.mubr.f32.mxu0 0.0
    %1537 = vmatmul.mubr.f32.gmra.mxu0 %v104
    %v1538 = vpop.f32.mrf.mxu0
    %v1539 = vadd.f32 %v1354, %v1538
    %v1540 = vpop.f32.mrf.mxu0
    %v1541 = vadd.f32 %v1354, %v1540
    %1542 = vmatprep.mubr.f32.mxu0 0.0
    %1543 = vmatmul.mubr.f32.gmra.mxu0 %v107
    %v1544 = vpop.f32.mrf.mxu0
    %v1545 = vadd.f32 %v1359, %v1544
    %v1546 = vpop.f32.mrf.mxu0
    %v1547 = vadd.f32 %v1359, %v1546
    %1548 = vmatprep.mubr.f32.mxu0 0.0
    %1549 = vmatmul.mubr.f32.gmra.mxu0 %v110
    %v1550 = vpop.f32.mrf.mxu0
    %v1551 = vadd.f32 %v1364, %v1550
    %v1552 = vpop.f32.mrf.mxu0
    %v1553 = vadd.f32 %v1364, %v1552
    %1554 = vmatprep.mubr.f32.mxu0 0.0
    %1555 = vmatmul.mubr.f32.gmra.mxu0 %v113
    %v1556 = vpop.f32.mrf.mxu0
    %v1557 = vadd.f32 %v1369, %v1556
    %v1558 = vpop.f32.mrf.mxu0
    %v1559 = vadd.f32 %v1369, %v1558
    %1560 = vdwg.mxu0
    %v1561 = vmax.f32 %v1450, 0.0
    %v1562 = vmax.f32 %v1452, 0.0
    %v1563 = vmax.f32 %v1539, 0.0
    %v1564 = vmax.f32 %v1541, 0.0
    %v1565 = vmax.f32 %v1456, 0.0
    %v1566 = vmax.f32 %v1458, 0.0
    %v1567 = vmax.f32 %v1545, 0.0
    %v1568 = vmax.f32 %v1547, 0.0
    %v1569 = vmax.f32 %v1462, 0.0
    %v1570 = vmax.f32 %v1464, 0.0
    %v1571 = vmax.f32 %v1551, 0.0
    %v1572 = vmax.f32 %v1553, 0.0
    %v1573 = vmax.f32 %v1468, 0.0
    %v1574 = vmax.f32 %v1470, 0.0
    %v1575 = vmax.f32 %v1557, 0.0
    %v1576 = vmax.f32 %v1559, 0.0
    %1577 = vmatprep.subr.mxu0 0.0
    %1578 = vmatpush1.msra.mxu0 0.0
    %1579 = vmatprep.subr.mxu0 0.0
    %1580 = vmatpush1.msra.mxu0 0.0
    %1581 = vmatprep.subr.mxu0 0.0
    %1582 = vmatpush1.msra.mxu0 0.0
    %1583 = vmatprep.subr.mxu0 0.0
    %1584 = vmatpush1.msra.mxu0 0.0
    %1585 = vmatprep.subr.mxu0 0.0
    %1586 = vmatpush1.msra.mxu0 0.0
    %1587 = vmatprep.subr.mxu0 0.0
    %1588 = vmatpush1.msra.mxu0 0.0
    %1589 = vmatprep.subr.mxu0 0.0
    %1590 = vmatpush1.msra.mxu0 0.0
    %1591 = vmatprep.subr.mxu0 0.0
    %1592 = vmatpush1.msra.mxu0 0.0
    %1593 = vmatprep.subr.mxu0 0.0
    %1594 = vmatpush1.msra.mxu0 0.0
    %1595 = vmatprep.subr.mxu0 0.0
    %1596 = vmatpush1.msra.mxu0 0.0
    %1597 = vmatprep.subr.mxu0 0.0
    %1598 = vmatpush1.msra.mxu0 0.0
    %1599 = vmatprep.subr.mxu0 0.0
    %1600 = vmatpush1.msra.mxu0 0.0
    %1601 = vmatprep.subr.mxu0 %v1574
    %1602 = vmatpush1.msra.mxu0 %v1573
    %1603 = vmatprep.subr.mxu0 %v1570
    %1604 = vmatpush1.msra.mxu0 %v1569
    %1605 = vmatprep.subr.mxu0 %v1566
    %1606 = vmatpush1.msra.mxu0 %v1565
    %1607 = vmatprep.subr.mxu0 %v1562
    %1608 = vmatpush1.msra.mxu0 %v1561
    %1609 = vmatprep.subr.mxu0 0.0
    %1610 = vmatpush2.msra.mxu0 0.0
    %1611 = vmatprep.subr.mxu0 0.0
    %1612 = vmatpush2.msra.mxu0 0.0
    %1613 = vmatprep.subr.mxu0 0.0
    %1614 = vmatpush2.msra.mxu0 0.0
    %1615 = vmatprep.subr.mxu0 0.0
    %1616 = vmatpush2.msra.mxu0 0.0
    %1617 = vmatprep.subr.mxu0 0.0
    %1618 = vmatpush2.msra.mxu0 0.0
    %1619 = vmatprep.subr.mxu0 0.0
    %1620 = vmatpush2.msra.mxu0 0.0
    %1621 = vmatprep.subr.mxu0 0.0
    %1622 = vmatpush2.msra.mxu0 0.0
    %1623 = vmatprep.subr.mxu0 0.0
    %1624 = vmatpush2.msra.mxu0 0.0
    %1625 = vmatprep.subr.mxu0 0.0
    %1626 = vmatpush2.msra.mxu0 0.0
    %1627 = vmatprep.subr.mxu0 0.0
    %1628 = vmatpush2.msra.mxu0 0.0
    %1629 = vmatprep.subr.mxu0 0.0
    %1630 = vmatpush2.msra.mxu0 0.0
    %1631 = vmatprep.subr.mxu0 0.0
    %1632 = vmatpush2.msra.mxu0 0.0
    %1633 = vmatprep.subr.mxu0 0.0
    %1634 = vmatpush2.msra.mxu0 0.0
    %1635 = vmatprep.subr.mxu0 0.0
    %1636 = vmatpush2.msra.mxu0 0.0
    %1637 = vmatprep.subr.mxu0 0.0
    %1638 = vmatpush2.msra.mxu0 0.0
    %1639 = vmatprep.subr.mxu0 0.0
    %1640 = vmatpush2.msra.mxu0 0.0
    %1641 = vmatprep.mubr.f32.mxu0 0.0
    %1642 = vmatmul.mubr.f32.gmra.mxu0 %v327
    %v1643 = vpop.f32.mrf.mxu0
    %v1644 = vadd.f32 %v323, %v1643
    %v1645 = vpop.f32.mrf.mxu0
    %v1646 = vadd.f32 %v323, %v1645
    %1647 = vdwg.mxu0
    %1648 = vmatprep.subr.mxu0 0.0
    %1649 = vmatpush1.msra.mxu0 0.0
    %1650 = vmatprep.subr.mxu0 0.0
    %1651 = vmatpush1.msra.mxu0 0.0
    %1652 = vmatprep.subr.mxu0 0.0
    %1653 = vmatpush1.msra.mxu0 0.0
    %1654 = vmatprep.subr.mxu0 0.0
    %1655 = vmatpush1.msra.mxu0 0.0
    %1656 = vmatprep.subr.mxu0 0.0
    %1657 = vmatpush1.msra.mxu0 0.0
    %1658 = vmatprep.subr.mxu0 0.0
    %1659 = vmatpush1.msra.mxu0 0.0
    %1660 = vmatprep.subr.mxu0 0.0
    %1661 = vmatpush1.msra.mxu0 0.0
    %1662 = vmatprep.subr.mxu0 0.0
    %1663 = vmatpush1.msra.mxu0 0.0
    %1664 = vmatprep.subr.mxu0 0.0
    %1665 = vmatpush1.msra.mxu0 0.0
    %1666 = vmatprep.subr.mxu0 0.0
    %1667 = vmatpush1.msra.mxu0 0.0
    %1668 = vmatprep.subr.mxu0 0.0
    %1669 = vmatpush1.msra.mxu0 0.0
    %1670 = vmatprep.subr.mxu0 0.0
    %1671 = vmatpush1.msra.mxu0 0.0
    %1672 = vmatprep.subr.mxu0 %v1576
    %1673 = vmatpush1.msra.mxu0 %v1575
    %1674 = vmatprep.subr.mxu0 %v1572
    %1675 = vmatpush1.msra.mxu0 %v1571
    %1676 = vmatprep.subr.mxu0 %v1568
    %1677 = vmatpush1.msra.mxu0 %v1567
    %1678 = vmatprep.subr.mxu0 %v1564
    %1679 = vmatpush1.msra.mxu0 %v1563
    %1680 = vmatprep.subr.mxu0 0.0
    %1681 = vmatpush2.msra.mxu0 0.0
    %1682 = vmatprep.subr.mxu0 0.0
    %1683 = vmatpush2.msra.mxu0 0.0
    %1684 = vmatprep.subr.mxu0 0.0
    %1685 = vmatpush2.msra.mxu0 0.0
    %1686 = vmatprep.subr.mxu0 0.0
    %1687 = vmatpush2.msra.mxu0 0.0
    %1688 = vmatprep.subr.mxu0 0.0
    %1689 = vmatpush2.msra.mxu0 0.0
    %1690 = vmatprep.subr.mxu0 0.0
    %1691 = vmatpush2.msra.mxu0 0.0
    %1692 = vmatprep.subr.mxu0 0.0
    %1693 = vmatpush2.msra.mxu0 0.0
    %1694 = vmatprep.subr.mxu0 0.0
    %1695 = vmatpush2.msra.mxu0 0.0
    %1696 = vmatprep.subr.mxu0 0.0
    %1697 = vmatpush2.msra.mxu0 0.0
    %1698 = vmatprep.subr.mxu0 0.0
    %1699 = vmatpush2.msra.mxu0 0.0
    %1700 = vmatprep.subr.mxu0 0.0
    %1701 = vmatpush2.msra.mxu0 0.0
    %1702 = vmatprep.subr.mxu0 0.0
    %1703 = vmatpush2.msra.mxu0 0.0
    %1704 = vmatprep.subr.mxu0 0.0
    %1705 = vmatpush2.msra.mxu0 0.0
    %1706 = vmatprep.subr.mxu0 0.0
    %1707 = vmatpush2.msra.mxu0 0.0
    %1708 = vmatprep.subr.mxu0 0.0
    %1709 = vmatpush2.msra.mxu0 0.0
    %1710 = vmatprep.subr.mxu0 0.0
    %1711 = vmatpush2.msra.mxu0 0.0
    %1712 = vmatprep.mubr.f32.mxu0 0.0
    %1713 = vmatmul.mubr.f32.gmra.mxu0 %v327
    %v1714 = vpop.f32.mrf.mxu0
    %v1715 = vadd.f32 %v323, %v1714
    %v1716 = vpop.f32.mrf.mxu0
    %v1717 = vadd.f32 %v323, %v1716
    %1718 = vdwg.mxu0
    %v1719 = vstv %s1343
    %v1720 = vmul.f32 %v1719, %v1644
    %v1721 = vmul.f32 %v1719, %v1646
    %v1722 = vmul.f32 %v1719, %v1715
    %v1723 = vmul.f32 %v1719, %v1717
    %v1728 = vcombine.low %v1720, %v1721
    %v1729 = vcombine.low %v1722, %v1723
    %v1732 = vsub.f32 %v1341, %v1728
    %v1733 = vsub.f32 %v1342, %v1729
    %v1734 = vstv %s1344
    %v1735 = vmul.f32 %v1732, %v1734
    %v1736 = vmul.f32 %v1733, %v1734
    %v1737 = vmax.f32 %v1735, -1.0
    %v1738 = vmax.f32 %v1736, -1.0
    %v1739 = vmin.f32 %v1737, 1.0
    %v1740 = vmin.f32 %v1738, 1.0
    %v1741 = vstv %s1345
    %v1742 = vmul.f32 %v1741, %v1739
    %v1743 = vmul.f32 %v1741, %v1740
    %v1744 = vstv %s1346
    %v1745 = vmul.f32 %v1744, %v1644
    %v1746 = vmul.f32 %v1744, %v1646
    %v1747 = vmul.f32 %v1744, %v1715
    %v1748 = vmul.f32 %v1744, %v1717
    %v1753 = vcombine.low %v1745, %v1746
    %v1754 = vcombine.low %v1747, %v1748
    %v1757 = vadd.f32 %v1742, %v1753
    %v1758 = vadd.f32 %v1743, %v1754
    %v1759 = vld [vmem:[%s8] sm:$0xff]
    %v1760 = vld [vmem:[%s8 + $0x8] sm:$0xff]
    %v1761 = vld [vmem:[%s8 + $0x10] sm:$0xff]
    %v1762 = vld [vmem:[%s8 + $0x18] sm:$0xff]
    %v1763 = vld [vmem:[%s8 + $0x20] sm:$0xff]
    %v1764 = vld [vmem:[%s8 + $0x28] sm:$0xff]
    %v1765 = vld [vmem:[%s8 + $0x30] sm:$0xff]
    %v1766 = vld [vmem:[%s8 + $0x38] sm:$0xff]
    %v1767 = vld [vmem:[%s8 + $0x40] sm:$0xff]
    %v1768 = vld [vmem:[%s8 + $0x48] sm:$0xff]
    %v1769 = vld [vmem:[%s8 + $0x50] sm:$0xff]
    %v1770 = vld [vmem:[%s8 + $0x58] sm:$0xff]
    %v1771 = vld [vmem:[%s8 + $0x60] sm:$0xff]
    %v1772 = vld [vmem:[%s8 + $0x68] sm:$0xff]
    %v1773 = vld [vmem:[%s8 + $0x70] sm:$0xff]
    %v1774 = vld [vmem:[%s8 + $0x78] sm:$0xff]
    %v1775 = vld [vmem:[%s8 + $0x80] sm:$0xff]
    %v1776 = vld [vmem:[%s8 + $0x88] sm:$0xff]
    %v1777 = vld [vmem:[%s8 + $0x90] sm:$0xff]
    %v1778 = vld [vmem:[%s8 + $0x98] sm:$0xff]
    %v1779 = vld [vmem:[%s8 + $0xa0] sm:$0xff]
    %v1780 = vld [vmem:[%s8 + $0xa8] sm:$0xff]
    %v1781 = vld [vmem:[%s8 + $0xb0] sm:$0xff]
    %v1782 = vld [vmem:[%s8 + $0xb8] sm:$0xff]
    %v1783 = vld [vmem:[%s8 + $0xc0] sm:$0xff]
    %v1784 = vld [vmem:[%s8 + $0xc8] sm:$0xff]
    %v1785 = vld [vmem:[%s8 + $0xd0] sm:$0xff]
    %v1786 = vld [vmem:[%s8 + $0xd8] sm:$0xff]
    %v1787 = vld [vmem:[%s8 + $0xe0] sm:$0xff]
    %v1788 = vld [vmem:[%s8 + $0xe8] sm:$0xff]
    %v1789 = vld [vmem:[%s8 + $0xf0] sm:$0xff]
    %v1790 = vld [vmem:[%s8 + $0xf8] sm:$0xff]
    %v1791 = vld [vmem:[%s8 + $0x100] sm:$0xff]
    %v1792 = vld [vmem:[%s8 + $0x108] sm:$0xff]
    %v1793 = vld [vmem:[%s8 + $0x110] sm:$0xff]
    %v1794 = vld [vmem:[%s8 + $0x118] sm:$0xff]
    %v1795 = vld [vmem:[%s8 + $0x120] sm:$0xff]
    %v1796 = vld [vmem:[%s8 + $0x128] sm:$0xff]
    %v1797 = vld [vmem:[%s8 + $0x130] sm:$0xff]
    %v1798 = vld [vmem:[%s8 + $0x138] sm:$0xff]
    %v1799 = vld [vmem:[%s8 + $0x140] sm:$0xff]
    %v1800 = vld [vmem:[%s8 + $0x148] sm:$0xff]
    %v1801 = vld [vmem:[%s8 + $0x150] sm:$0xff]
    %v1802 = vld [vmem:[%s8 + $0x158] sm:$0xff]
    %v1803 = vld [vmem:[%s8 + $0x160] sm:$0xff]
    %v1804 = vld [vmem:[%s8 + $0x168] sm:$0xff]
    %v1805 = vld [vmem:[%s8 + $0x170] sm:$0xff]
    %v1806 = vld [vmem:[%s8 + $0x178] sm:$0xff]
    %v1807 = vld [vmem:[%s8 + $0x180] sm:$0xff]
    %v1808 = vld [vmem:[%s8 + $0x188] sm:$0xff]
    %v1809 = vld [vmem:[%s8 + $0x190] sm:$0xff]
    %v1810 = vld [vmem:[%s8 + $0x198] sm:$0xff]
    %v1811 = vld [vmem:[%s8 + $0x1a0] sm:$0xff]
    %v1812 = vld [vmem:[%s8 + $0x1a8] sm:$0xff]
    %v1813 = vld [vmem:[%s8 + $0x1b0] sm:$0xff]
    %v1814 = vld [vmem:[%s8 + $0x1b8] sm:$0xff]
    %v1815 = vld [vmem:[%s8 + $0x1c0] sm:$0xff]
    %v1816 = vld [vmem:[%s8 + $0x1c8] sm:$0xff]
    %v1817 = vld [vmem:[%s8 + $0x1d0] sm:$0xff]
    %v1818 = vld [vmem:[%s8 + $0x1d8] sm:$0xff]
    %v1819 = vld [vmem:[%s8 + $0x1e0] sm:$0xff]
    %v1820 = vld [vmem:[%s8 + $0x1e8] sm:$0xff]
    %v1821 = vld [vmem:[%s8 + $0x1f0] sm:$0xff]
    %v1822 = vld [vmem:[%s8 + $0x1f8] sm:$0xff]
    %v1825 = vcombine.high %v1757, %v1757
    %v1826 = vcombine.high %v1758, %v1758
    %1829 = vmatprep.subr.mxu0 0.0
    %1830 = vmatpush1.msra.mxu0 %v1774
    %1831 = vmatprep.subr.mxu0 0.0
    %1832 = vmatpush1.msra.mxu0 %v1773
    %1833 = vmatprep.subr.mxu0 0.0
    %1834 = vmatpush1.msra.mxu0 %v1772
    %1835 = vmatprep.subr.mxu0 0.0
    %1836 = vmatpush1.msra.mxu0 %v1771
    %1837 = vmatprep.subr.mxu0 0.0
    %1838 = vmatpush1.msra.mxu0 %v1770
    %1839 = vmatprep.subr.mxu0 0.0
    %1840 = vmatpush1.msra.mxu0 %v1769
    %1841 = vmatprep.subr.mxu0 0.0
    %1842 = vmatpush1.msra.mxu0 %v1768
    %1843 = vmatprep.subr.mxu0 0.0
    %1844 = vmatpush1.msra.mxu0 %v1767
    %1845 = vmatprep.subr.mxu0 0.0
    %1846 = vmatpush1.msra.mxu0 %v1766
    %1847 = vmatprep.subr.mxu0 0.0
    %1848 = vmatpush1.msra.mxu0 %v1765
    %1849 = vmatprep.subr.mxu0 0.0
    %1850 = vmatpush1.msra.mxu0 %v1764
    %1851 = vmatprep.subr.mxu0 0.0
    %1852 = vmatpush1.msra.mxu0 %v1763
    %1853 = vmatprep.subr.mxu0 0.0
    %1854 = vmatpush1.msra.mxu0 %v1762
    %1855 = vmatprep.subr.mxu0 0.0
    %1856 = vmatpush1.msra.mxu0 %v1761
    %1857 = vmatprep.subr.mxu0 0.0
    %1858 = vmatpush1.msra.mxu0 %v1760
    %1859 = vmatprep.subr.mxu0 0.0
    %1860 = vmatpush1.msra.mxu0 %v1759
    %1861 = vmatprep.subr.mxu0 0.0
    %1862 = vmatpush2.msra.mxu0 %v1790
    %1863 = vmatprep.subr.mxu0 0.0
    %1864 = vmatpush2.msra.mxu0 %v1789
    %1865 = vmatprep.subr.mxu0 0.0
    %1866 = vmatpush2.msra.mxu0 %v1788
    %1867 = vmatprep.subr.mxu0 0.0
    %1868 = vmatpush2.msra.mxu0 %v1787
    %1869 = vmatprep.subr.mxu0 0.0
    %1870 = vmatpush2.msra.mxu0 %v1786
    %1871 = vmatprep.subr.mxu0 0.0
    %1872 = vmatpush2.msra.mxu0 %v1785
    %1873 = vmatprep.subr.mxu0 0.0
    %1874 = vmatpush2.msra.mxu0 %v1784
    %1875 = vmatprep.subr.mxu0 0.0
    %1876 = vmatpush2.msra.mxu0 %v1783
    %1877 = vmatprep.subr.mxu0 0.0
    %1878 = vmatpush2.msra.mxu0 %v1782
    %1879 = vmatprep.subr.mxu0 0.0
    %1880 = vmatpush2.msra.mxu0 %v1781
    %1881 = vmatprep.subr.mxu0 0.0
    %1882 = vmatpush2.msra.mxu0 %v1780
    %1883 = vmatprep.subr.mxu0 0.0
    %1884 = vmatpush2.msra.mxu0 %v1779
    %1885 = vmatprep.subr.mxu0 0.0
    %1886 = vmatpush2.msra.mxu0 %v1778
    %1887 = vmatprep.subr.mxu0 0.0
    %1888 = vmatpush2.msra.mxu0 %v1777
    %1889 = vmatprep.subr.mxu0 0.0
    %1890 = vmatpush2.msra.mxu0 %v1776
    %1891 = vmatprep.subr.mxu0 0.0
    %1892 = vmatpush2.msra.mxu0 %v1775
    %1893 = vmatprep.mubr.f32.mxu0 %v1825
    %1894 = vmatmul.mubr.f32.gmra.mxu0 %v1757
    %v1895 = vpop.f32.mrf.mxu0
    %v1896 = vadd.f32 1.0, %v1895
    %v1897 = vpop.f32.mrf.mxu0
    %1898 = vdwg.mxu0
    %1899 = vmatprep.subr.mxu0 0.0
    %1900 = vmatpush1.msra.mxu0 %v1806
    %1901 = vmatprep.subr.mxu0 0.0
    %1902 = vmatpush1.msra.mxu0 %v1805
    %1903 = vmatprep.subr.mxu0 0.0
    %1904 = vmatpush1.msra.mxu0 %v1804
    %1905 = vmatprep.subr.mxu0 0.0
    %1906 = vmatpush1.msra.mxu0 %v1803
    %1907 = vmatprep.subr.mxu0 0.0
    %1908 = vmatpush1.msra.mxu0 %v1802
    %1909 = vmatprep.subr.mxu0 0.0
    %1910 = vmatpush1.msra.mxu0 %v1801
    %1911 = vmatprep.subr.mxu0 0.0
    %1912 = vmatpush1.msra.mxu0 %v1800
    %1913 = vmatprep.subr.mxu0 0.0
    %1914 = vmatpush1.msra.mxu0 %v1799
    %1915 = vmatprep.subr.mxu0 0.0
    %1916 = vmatpush1.msra.mxu0 %v1798
    %1917 = vmatprep.subr.mxu0 0.0
    %1918 = vmatpush1.msra.mxu0 %v1797
    %1919 = vmatprep.subr.mxu0 0.0
    %1920 = vmatpush1.msra.mxu0 %v1796
    %1921 = vmatprep.subr.mxu0 0.0
    %1922 = vmatpush1.msra.mxu0 %v1795
    %1923 = vmatprep.subr.mxu0 0.0
    %1924 = vmatpush1.msra.mxu0 %v1794
    %1925 = vmatprep.subr.mxu0 0.0
    %1926 = vmatpush1.msra.mxu0 %v1793
    %1927 = vmatprep.subr.mxu0 0.0
    %1928 = vmatpush1.msra.mxu0 %v1792
    %1929 = vmatprep.subr.mxu0 0.0
    %1930 = vmatpush1.msra.mxu0 %v1791
    %1931 = vmatprep.subr.mxu0 0.0
    %1932 = vmatpush2.msra.mxu0 %v1822
    %1933 = vmatprep.subr.mxu0 0.0
    %1934 = vmatpush2.msra.mxu0 %v1821
    %1935 = vmatprep.subr.mxu0 0.0
    %1936 = vmatpush2.msra.mxu0 %v1820
    %1937 = vmatprep.subr.mxu0 0.0
    %1938 = vmatpush2.msra.mxu0 %v1819
    %1939 = vmatprep.subr.mxu0 0.0
    %1940 = vmatpush2.msra.mxu0 %v1818
    %1941 = vmatprep.subr.mxu0 0.0
    %1942 = vmatpush2.msra.mxu0 %v1817
    %1943 = vmatprep.subr.mxu0 0.0
    %1944 = vmatpush2.msra.mxu0 %v1816
    %1945 = vmatprep.subr.mxu0 0.0
    %1946 = vmatpush2.msra.mxu0 %v1815
    %1947 = vmatprep.subr.mxu0 0.0
    %1948 = vmatpush2.msra.mxu0 %v1814
    %1949 = vmatprep.subr.mxu0 0.0
    %1950 = vmatpush2.msra.mxu0 %v1813
    %1951 = vmatprep.subr.mxu0 0.0
    %1952 = vmatpush2.msra.mxu0 %v1812
    %1953 = vmatprep.subr.mxu0 0.0
    %1954 = vmatpush2.msra.mxu0 %v1811
    %1955 = vmatprep.subr.mxu0 0.0
    %1956 = vmatpush2.msra.mxu0 %v1810
    %1957 = vmatprep.subr.mxu0 0.0
    %1958 = vmatpush2.msra.mxu0 %v1809
    %1959 = vmatprep.subr.mxu0 0.0
    %1960 = vmatpush2.msra.mxu0 %v1808
    %1961 = vmatprep.subr.mxu0 0.0
    %1962 = vmatpush2.msra.mxu0 %v1807
    %1963 = vmatprep.mubr.f32.mxu0 %v1826
    %1964 = vmatmul.mubr.f32.gmra.mxu0 %v1758
    %v1965 = vpop.f32.mrf.mxu0
    %v1966 = vadd.f32 %v1896, %v1965
    %v1967 = vpop.f32.mrf.mxu0
    %1968 = vdwg.mxu0
    %v1969 = vmul.f32 %v1966, 0.5
    %v1970 = vld [vmem:[%s6] sm:$0xff]
    %v1971 = vld [vmem:[%s6 + $0x8] sm:$0x3]
    %v1972 = vld [vmem:[%s7] sm:$0xff]
    %v1973 = vld [vmem:[%s7 + $0x8] sm:$0x3]
    %1975 = vset.pattern.permute.xlu0 0
    %1976 = vperm.xlu0 %1975, %v1972
    %v1977 = vpop.permute.xlu0 %1976
    %1980 = vset.pattern.permute.xlu0 0
    %1981 = vperm.xlu0 %1980, %v1973
    %v1982 = vpop.permute.xlu0 %1981
    %v1985 = vsel %vm102, %v1970, 0
    %v1988 = vsel %vm102, %v1971, 0
    %v1991 = vsel %vm115, %v1969, 0
    %1993 = vmatprep.subr.mxu0 0.0
    %1994 = vmatpush1.msra.mxu0 0.0
    %1995 = vmatprep.subr.mxu0 0.0
    %1996 = vmatpush1.msra.mxu0 0.0
    %1997 = vmatprep.subr.mxu0 0.0
    %1998 = vmatpush1.msra.mxu0 0.0
    %1999 = vmatprep.subr.mxu0 0.0
    %2000 = vmatpush1.msra.mxu0 0.0
    %2001 = vmatprep.subr.mxu0 0.0
    %2002 = vmatpush1.msra.mxu0 0.0
    %2003 = vmatprep.subr.mxu0 0.0
    %2004 = vmatpush1.msra.mxu0 0.0
    %2005 = vmatprep.subr.mxu0 0.0
    %2006 = vmatpush1.msra.mxu0 0.0
    %2007 = vmatprep.subr.mxu0 0.0
    %2008 = vmatpush1.msra.mxu0 0.0
    %2009 = vmatprep.subr.mxu0 0.0
    %2010 = vmatpush1.msra.mxu0 0.0
    %2011 = vmatprep.subr.mxu0 0.0
    %2012 = vmatpush1.msra.mxu0 0.0
    %2013 = vmatprep.subr.mxu0 0.0
    %2014 = vmatpush1.msra.mxu0 0.0
    %2015 = vmatprep.subr.mxu0 0.0
    %2016 = vmatpush1.msra.mxu0 0.0
    %2017 = vmatprep.subr.mxu0 0.0
    %2018 = vmatpush1.msra.mxu0 0.0
    %2019 = vmatprep.subr.mxu0 0.0
    %2020 = vmatpush1.msra.mxu0 0.0
    %2021 = vmatprep.subr.mxu0 0.0
    %2022 = vmatpush1.msra.mxu0 0.0
    %2023 = vmatprep.subr.mxu0 0.0
    %2024 = vmatpush1.msra.mxu0 %v1991
    %2025 = vmatprep.subr.mxu0 0.0
    %2026 = vmatpush2.msra.mxu0 0.0
    %2027 = vmatprep.subr.mxu0 0.0
    %2028 = vmatpush2.msra.mxu0 0.0
    %2029 = vmatprep.subr.mxu0 0.0
    %2030 = vmatpush2.msra.mxu0 0.0
    %2031 = vmatprep.subr.mxu0 0.0
    %2032 = vmatpush2.msra.mxu0 0.0
    %2033 = vmatprep.subr.mxu0 0.0
    %2034 = vmatpush2.msra.mxu0 0.0
    %2035 = vmatprep.subr.mxu0 0.0
    %2036 = vmatpush2.msra.mxu0 0.0
    %2037 = vmatprep.subr.mxu0 0.0
    %2038 = vmatpush2.msra.mxu0 0.0
    %2039 = vmatprep.subr.mxu0 0.0
    %2040 = vmatpush2.msra.mxu0 0.0
    %2041 = vmatprep.subr.mxu0 0.0
    %2042 = vmatpush2.msra.mxu0 0.0
    %2043 = vmatprep.subr.mxu0 0.0
    %2044 = vmatpush2.msra.mxu0 0.0
    %2045 = vmatprep.subr.mxu0 0.0
    %2046 = vmatpush2.msra.mxu0 0.0
    %2047 = vmatprep.subr.mxu0 0.0
    %2048 = vmatpush2.msra.mxu0 0.0
    %2049 = vmatprep.subr.mxu0 0.0
    %2050 = vmatpush2.msra.mxu0 0.0
    %2051 = vmatprep.subr.mxu0 0.0
    %2052 = vmatpush2.msra.mxu0 0.0
    %2053 = vmatprep.subr.mxu0 0.0
    %2054 = vmatpush2.msra.mxu0 0.0
    %2055 = vmatprep.subr.mxu0 0.0
    %2056 = vmatpush2.msra.mxu0 0.0
    %2057 = vmatprep.mubr.f32.mxu0 0.0
    %2058 = vmatmul.mubr.f32.gmra.mxu0 %v1985
    %v2059 = vpop.f32.mrf.mxu0
    %v2060 = vadd.f32 %v1977, %v2059
    %v2061 = vpop.f32.mrf.mxu0
    %2062 = vmatprep.mubr.f32.mxu0 0.0
    %2063 = vmatmul.mubr.f32.gmra.mxu0 %v1988
    %v2064 = vpop.f32.mrf.mxu0
    %v2065 = vadd.f32 %v1982, %v2064
    %v2066 = vpop.f32.mrf.mxu0
    %2067 = vdwg.mxu0
    %vm2068 = vcmask 15360
    %2069 = vst.msk [vmem:[%s10] sm:$0xff] %vm2068, %v2060
    %vm2070 = vcmask 9216
    %2071 = vst.msk [vmem:[%s10 + $0x8] sm:$0x3] %vm2070, %v2065
    // Predicated region
    $region46: #{denoised_classifier_forward.1} parent=1 // pred_check
      _
    $region47: #{denoised_classifier_forward.1} parent=1 // pred_check_branch
      %2073 = sbr.rel (0) target = $region49
    $region48: #{denoised_classifier_forward.1} parent=1 // pred_region
      _
    $region49: #{denoised_classifier_forward.1} parent=1 // pred_fallthru
      _
    // Predicated region
    $region50: #{denoised_classifier_forward.1} parent=1 // pred_check
      _
    $region51: #{denoised_classifier_forward.1} parent=1 // pred_check_branch
      %2075 = sbr.rel (0) target = $region53
    $region52: #{denoised_classifier_forward.1} parent=1 // pred_region
      _
    $region53: #{denoised_classifier_forward.1} parent=1 // pred_fallthru
      _
    %2076 = vsyncpa [#allocation3], 1

</llo_original>
